<compile_context>
chip_gen: v7x
topology: tpu7x:2x2x1
jax: 0.10.0
libtpu: 0.0.40
codegen_flags: <defaults>
</compile_context>

<pallas_src>
import jax
import jax.numpy as jnp
import numpy as np
from jax.experimental import pallas as pl
from jax.experimental.pallas import tpu as pltpu


def _refiner_kernel(x_ref, wih_ref, whh_ref, b_ref, wa_ref, ba_ref, out_ref):
    """Whole-sequence LSTM recurrence + per-timestep attention over batch.

    x_ref   : (T*B, R)  time_embeds flattened over (time, batch)
    wih_ref : (R, 4R)   W_ih^T with gate columns permuted to (i, f, o, g)
    whh_ref : (R, 4R)   W_hh^T with gate columns permuted to (i, f, o, g)
    b_ref   : (1, 4R)   b_ih + b_hh, same gate permutation
    wa_ref  : (1, R)    attention Linear(rank, 1) weight as a lane-dense row
    ba_ref  : (1, 1)    attention bias
    out_ref : (T, R)    context vector per timestep
    """
    T, R = out_ref.shape
    TB = x_ref.shape[0]
    B = TB // T

    # Hoisted input projection: one matmul for the whole sequence.
    gates_x = (jnp.dot(x_ref[...], wih_ref[...],
                       preferred_element_type=jnp.float32) + b_ref[...])  # (T*B, 4R)

    whh = whh_ref[...]        # (R, 4R)
    wa = wa_ref[...]          # (1, R)
    ba = ba_ref[...]          # (1, 1)

    h = jnp.zeros((B, R), jnp.float32)
    c = jnp.zeros((B, R), jnp.float32)
    ctx_rows = []

    # Static unroll over T: only h @ W_hh^T remains on the serial chain.
    for t in range(T):
        gates = gates_x[t * B:(t + 1) * B, :] + jnp.dot(
            h, whh, preferred_element_type=jnp.float32)       # (B, 4R)

        # Gate columns are pre-permuted to (i, f, o, g): one contiguous
        # sigmoid slab and one contiguous tanh slab (single EUP pass each).
        sig = jax.nn.sigmoid(gates[:, 0:3 * R])                # (B, 3R)
        g_g = jnp.tanh(gates[:, 3 * R:4 * R])                  # (B, R)
        i_g = sig[:, 0 * R:1 * R]
        f_g = sig[:, 1 * R:2 * R]
        o_g = sig[:, 2 * R:3 * R]

        c = f_g * c + i_g * g_g
        h = o_g * jnp.tanh(c)

        # Attention over the batch axis for timestep t (softmax over B):
        # VPU multiply + cross-lane reduce instead of an N=1 MXU matmul.
        s = jnp.tanh(jnp.sum(h * wa, axis=-1, keepdims=True) + ba)    # (B, 1)
        s = s - jnp.max(s, axis=0, keepdims=True)
        e = jnp.exp(s)
        w = e / jnp.sum(e, axis=0, keepdims=True)              # exact, off-chain
        ctx_rows.append(jnp.sum(w * h, axis=0, keepdims=True))        # (1, R)

    # Single writeback of the whole output block.
    out_ref[...] = jnp.concatenate(ctx_rows, axis=0)                  # (T, R)


def _permute_gate_cols(w_t):
    """Reorder (.., 4R) gate columns from PyTorch (i,f,g,o) to (i,f,o,g)."""
    i, f, g, o = jnp.split(w_t, 4, axis=-1)
    return jnp.concatenate([i, f, o, g], axis=-1)


def attn_lstm_time_refiner(time_embeds, W_ih, W_hh, b_ih, b_hh, W_a, b_a):
    """Pallas implementation of AttnLSTMTimeRefiner.forward.

    time_embeds: (T, B, R) float32
    W_ih, W_hh : (4R, R)   PyTorch LSTM weights (gate order i, f, g, o)
    b_ih, b_hh : (4R,)
    W_a        : (1, R)    attention Linear weight
    b_a        : (1,)      attention Linear bias
    returns    : (T, R) float32
    """
    T, B, R = time_embeds.shape
    x2d = jnp.asarray(time_embeds, jnp.float32).reshape(T * B, R)

    # Transpose to (R, 4R) and permute gate columns to (i, f, o, g) so the
    # kernel's sigmoid / tanh each touch one contiguous lane slab.
    wih_t = _permute_gate_cols(jnp.asarray(W_ih, jnp.float32).T)   # (R, 4R)
    whh_t = _permute_gate_cols(jnp.asarray(W_hh, jnp.float32).T)   # (R, 4R)
    bias = _permute_gate_cols(
        (jnp.asarray(b_ih, jnp.float32)
         + jnp.asarray(b_hh, jnp.float32)).reshape(1, 4 * R))      # (1, 4R)

    wa_row = jnp.asarray(W_a, jnp.float32).reshape(1, R)           # lane-dense row
    ba = jnp.asarray(b_a, jnp.float32).reshape(1, 1)

    vmem_spec = pl.BlockSpec(memory_space=pltpu.MemorySpace.VMEM)
    out = pl.pallas_call(
        _refiner_kernel,
        out_shape=jax.ShapeDtypeStruct((T, R), jnp.float32),
        in_specs=[vmem_spec] * 6,
        out_specs=vmem_spec,
    )(x2d, wih_t, whh_t, bias, wa_row, ba)
    return out


def _reference(time_embeds, W_ih, W_hh, b_ih, b_hh, W_a, b_a):
    """Pure-JAX reference mirroring the PyTorch forward pass."""
    T, B, R = time_embeds.shape

    def step(carry, x_t):
        h, c = carry
        gates = x_t @ W_ih.T + b_ih + h @ W_hh.T + b_hh
        i, f, g, o = jnp.split(gates, 4, axis=-1)
        i = jax.nn.sigmoid(i)
        f = jax.nn.sigmoid(f)
        g = jnp.tanh(g)
        o = jax.nn.sigmoid(o)
        c = f * c + i * g
        h = o * jnp.tanh(c)
        return (h, c), h

    init = (jnp.zeros((B, R), jnp.float32), jnp.zeros((B, R), jnp.float32))
    _, outputs = jax.lax.scan(step, init, time_embeds)          # (T, B, R)

    scores = jnp.tanh(outputs @ W_a.T + b_a).squeeze(-1)        # (T, B)
    weights = jax.nn.softmax(scores, axis=1)                    # softmax over batch
    ctx = jnp.sum(weights[..., None] * outputs, axis=1)         # (T, R)
    return ctx


if __name__ == "__main__":
    # Small shapes consistent with the module: seq T=8, batch B=2, rank R=32.
    T, B, R = 8, 2, 32

    key = jax.random.PRNGKey(0)
    kx, k1, k2, k3, k4, k5, k6 = jax.random.split(key, 7)
    scale = 1.0 / np.sqrt(R)

    time_embeds = jax.random.normal(kx, (T, B, R), dtype=jnp.float32)
    W_ih = scale * jax.random.normal(k1, (4 * R, R), dtype=jnp.float32)
    W_hh = scale * jax.random.normal(k2, (4 * R, R), dtype=jnp.float32)
    b_ih = scale * jax.random.normal(k3, (4 * R,), dtype=jnp.float32)
    b_hh = scale * jax.random.normal(k4, (4 * R,), dtype=jnp.float32)
    W_a = scale * jax.random.normal(k5, (1, R), dtype=jnp.float32)
    b_a = scale * jax.random.normal(k6, (1,), dtype=jnp.float32)
    # NOTE: self._time_linear and self.num_windows are defined in __init__ but
    # unused in forward(), so they are intentionally not materialized here.

    out = attn_lstm_time_refiner(time_embeds, W_ih, W_hh, b_ih, b_hh, W_a, b_a)
    out = jax.block_until_ready(out)

    ref = jax.block_until_ready(
        _reference(time_embeds, W_ih, W_hh, b_ih, b_hh, W_a, b_a))

    # Tolerance tightened vs. rev 2: the softmax denominator is now an exact
    # divide (the approximate EUP reciprocal was the dominant error source);
    # remaining drift is only MXU f32 matmul rounding over the 8-step chain.
    np.testing.assert_allclose(np.asarray(out), np.asarray(ref),
                               rtol=1e-3, atol=1e-3)
    print("KERNEL_OK")
</pallas_src>

<mosaic_0001>
module attributes {stable_mosaic.version = 11 : i64} {
  func.func @_refiner_kernel(%arg0: memref<16x32xf32, #tpu.memory_space<vmem>>, %arg1: memref<32x128xf32, #tpu.memory_space<vmem>>, %arg2: memref<32x128xf32, #tpu.memory_space<vmem>>, %arg3: memref<1x128xf32, #tpu.memory_space<vmem>>, %arg4: memref<1x32xf32, #tpu.memory_space<vmem>>, %arg5: memref<1x1xf32, #tpu.memory_space<vmem>>, %arg6: memref<8x32xf32, #tpu.memory_space<vmem>>) attributes {dimension_semantics = [], scalar_prefetch = 0 : i64, scratch_operands = 0 : i64, tpu.core_type = #tpu.core_type<tc>} {
    %c0 = arith.constant 0 : index
    %c0_0 = arith.constant 0 : index
    %0 = vector.load %arg0[%c0, %c0_0] : memref<16x32xf32, #tpu.memory_space<vmem>>, vector<16x32xf32>
    %c0_1 = arith.constant 0 : index
    %c0_2 = arith.constant 0 : index
    %1 = vector.load %arg1[%c0_1, %c0_2] : memref<32x128xf32, #tpu.memory_space<vmem>>, vector<32x128xf32>
    %cst = arith.constant dense<0.000000e+00> : vector<16x128xf32>
    %2 = tpu.matmul %0, %1, %cst {dimension_numbers = #tpu.dot_dimension_numbers<[1], [0], [0], [1], [0, 0, 1, 1], [], []>} : vector<16x32xf32>, vector<32x128xf32>, vector<16x128xf32> -> vector<16x128xf32>
    %c0_3 = arith.constant 0 : index
    %c0_4 = arith.constant 0 : index
    %3 = vector.load %arg3[%c0_3, %c0_4] : memref<1x128xf32, #tpu.memory_space<vmem>>, vector<1x128xf32>
    %4 = vector.broadcast %3 : vector<1x128xf32> to vector<16x128xf32>
    %5 = arith.addf %2, %4 : vector<16x128xf32>
    %c0_5 = arith.constant 0 : index
    %c0_6 = arith.constant 0 : index
    %6 = vector.load %arg2[%c0_5, %c0_6] : memref<32x128xf32, #tpu.memory_space<vmem>>, vector<32x128xf32>
    %c0_7 = arith.constant 0 : index
    %c0_8 = arith.constant 0 : index
    %7 = vector.load %arg4[%c0_7, %c0_8] : memref<1x32xf32, #tpu.memory_space<vmem>>, vector<1x32xf32>
    %c0_9 = arith.constant 0 : index
    %c0_10 = arith.constant 0 : index
    %8 = vector.load %arg5[%c0_9, %c0_10] : memref<1x1xf32, #tpu.memory_space<vmem>>, vector<1x1xf32>
    %cst_11 = arith.constant 0.000000e+00 : f32
    %9 = vector.broadcast %cst_11 : f32 to vector<2x32xf32>
    %cst_12 = arith.constant 0.000000e+00 : f32
    %10 = vector.broadcast %cst_12 : f32 to vector<2x32xf32>
    %11 = vector.extract_strided_slice %5 {offsets = [0, 0], sizes = [2, 128], strides = [1, 1]} : vector<16x128xf32> to vector<2x128xf32>
    %cst_13 = arith.constant dense<0.000000e+00> : vector<2x128xf32>
    %12 = tpu.matmul %9, %6, %cst_13 {dimension_numbers = #tpu.dot_dimension_numbers<[1], [0], [0], [1], [0, 0, 1, 1], [], []>} : vector<2x32xf32>, vector<32x128xf32>, vector<2x128xf32> -> vector<2x128xf32>
    %13 = arith.addf %11, %12 : vector<2x128xf32>
    %14 = vector.extract_strided_slice %13 {offsets = [0, 0], sizes = [2, 96], strides = [1, 1]} : vector<2x128xf32> to vector<2x96xf32>
    %15 = arith.negf %14 : vector<2x96xf32>
    %16 = math.exp %15 : vector<2x96xf32>
    %cst_14 = arith.constant 1.000000e+00 : f32
    %17 = vector.broadcast %cst_14 : f32 to vector<2x96xf32>
    %18 = arith.addf %17, %16 : vector<2x96xf32>
    %19 = arith.divf %17, %18 : vector<2x96xf32>
    %20 = vector.extract_strided_slice %13 {offsets = [0, 96], sizes = [2, 32], strides = [1, 1]} : vector<2x128xf32> to vector<2x32xf32>
    %21 = math.tanh %20 : vector<2x32xf32>
    %22 = vector.extract_strided_slice %19 {offsets = [0, 0], sizes = [2, 32], strides = [1, 1]} : vector<2x96xf32> to vector<2x32xf32>
    %23 = vector.extract_strided_slice %19 {offsets = [0, 32], sizes = [2, 32], strides = [1, 1]} : vector<2x96xf32> to vector<2x32xf32>
    %24 = vector.extract_strided_slice %19 {offsets = [0, 64], sizes = [2, 32], strides = [1, 1]} : vector<2x96xf32> to vector<2x32xf32>
    %25 = arith.mulf %23, %10 : vector<2x32xf32>
    %26 = arith.mulf %22, %21 : vector<2x32xf32>
    %27 = arith.addf %25, %26 : vector<2x32xf32>
    %28 = math.tanh %27 : vector<2x32xf32>
    %29 = arith.mulf %24, %28 : vector<2x32xf32>
    %30 = vector.broadcast %7 : vector<1x32xf32> to vector<2x32xf32>
    %31 = arith.mulf %29, %30 : vector<2x32xf32>
    %cst_15 = arith.constant dense<0.000000e+00> : vector<2xf32>
    %32 = vector.multi_reduction <add>, %31, %cst_15 [1] : vector<2x32xf32> to vector<2xf32>
    %33 = vector.shape_cast %32 : vector<2xf32> to vector<2x1xf32>
    %34 = vector.broadcast %8 : vector<1x1xf32> to vector<2x1xf32>
    %35 = arith.addf %33, %34 : vector<2x1xf32>
    %36 = math.tanh %35 : vector<2x1xf32>
    %cst_16 = arith.constant dense<0xFF800000> : vector<1xf32>
    %37 = vector.multi_reduction <maximumf>, %36, %cst_16 [0] : vector<2x1xf32> to vector<1xf32>
    %38 = vector.shape_cast %37 : vector<1xf32> to vector<1x1xf32>
    %39 = vector.broadcast %38 : vector<1x1xf32> to vector<2x1xf32>
    %40 = arith.subf %36, %39 : vector<2x1xf32>
    %41 = math.exp %40 : vector<2x1xf32>
    %cst_17 = arith.constant dense<0.000000e+00> : vector<1xf32>
    %42 = vector.multi_reduction <add>, %41, %cst_17 [0] : vector<2x1xf32> to vector<1xf32>
    %43 = vector.shape_cast %42 : vector<1xf32> to vector<1x1xf32>
    %44 = vector.broadcast %43 : vector<1x1xf32> to vector<2x1xf32>
    %45 = arith.divf %41, %44 : vector<2x1xf32>
    %46 = vector.broadcast %45 : vector<2x1xf32> to vector<2x32xf32>
    %47 = arith.mulf %46, %29 : vector<2x32xf32>
    %cst_18 = arith.constant dense<0.000000e+00> : vector<32xf32>
    %48 = vector.multi_reduction <add>, %47, %cst_18 [0] : vector<2x32xf32> to vector<32xf32>
    %49 = vector.shape_cast %48 : vector<32xf32> to vector<1x32xf32>
    %50 = vector.extract_strided_slice %5 {offsets = [2, 0], sizes = [2, 128], strides = [1, 1]} : vector<16x128xf32> to vector<2x128xf32>
    %cst_19 = arith.constant dense<0.000000e+00> : vector<2x128xf32>
    %51 = tpu.matmul %29, %6, %cst_19 {dimension_numbers = #tpu.dot_dimension_numbers<[1], [0], [0], [1], [0, 0, 1, 1], [], []>} : vector<2x32xf32>, vector<32x128xf32>, vector<2x128xf32> -> vector<2x128xf32>
    %52 = arith.addf %50, %51 : vector<2x128xf32>
    %53 = vector.extract_strided_slice %52 {offsets = [0, 0], sizes = [2, 96], strides = [1, 1]} : vector<2x128xf32> to vector<2x96xf32>
    %54 = arith.negf %53 : vector<2x96xf32>
    %55 = math.exp %54 : vector<2x96xf32>
    %cst_20 = arith.constant 1.000000e+00 : f32
    %56 = vector.broadcast %cst_20 : f32 to vector<2x96xf32>
    %57 = arith.addf %56, %55 : vector<2x96xf32>
    %58 = arith.divf %56, %57 : vector<2x96xf32>
    %59 = vector.extract_strided_slice %52 {offsets = [0, 96], sizes = [2, 32], strides = [1, 1]} : vector<2x128xf32> to vector<2x32xf32>
    %60 = math.tanh %59 : vector<2x32xf32>
    %61 = vector.extract_strided_slice %58 {offsets = [0, 0], sizes = [2, 32], strides = [1, 1]} : vector<2x96xf32> to vector<2x32xf32>
    %62 = vector.extract_strided_slice %58 {offsets = [0, 32], sizes = [2, 32], strides = [1, 1]} : vector<2x96xf32> to vector<2x32xf32>
    %63 = vector.extract_strided_slice %58 {offsets = [0, 64], sizes = [2, 32], strides = [1, 1]} : vector<2x96xf32> to vector<2x32xf32>
    %64 = arith.mulf %62, %27 : vector<2x32xf32>
    %65 = arith.mulf %61, %60 : vector<2x32xf32>
    %66 = arith.addf %64, %65 : vector<2x32xf32>
    %67 = math.tanh %66 : vector<2x32xf32>
    %68 = arith.mulf %63, %67 : vector<2x32xf32>
    %69 = vector.broadcast %7 : vector<1x32xf32> to vector<2x32xf32>
    %70 = arith.mulf %68, %69 : vector<2x32xf32>
    %cst_21 = arith.constant dense<0.000000e+00> : vector<2xf32>
    %71 = vector.multi_reduction <add>, %70, %cst_21 [1] : vector<2x32xf32> to vector<2xf32>
    %72 = vector.shape_cast %71 : vector<2xf32> to vector<2x1xf32>
    %73 = vector.broadcast %8 : vector<1x1xf32> to vector<2x1xf32>
    %74 = arith.addf %72, %73 : vector<2x1xf32>
    %75 = math.tanh %74 : vector<2x1xf32>
    %cst_22 = arith.constant dense<0xFF800000> : vector<1xf32>
    %76 = vector.multi_reduction <maximumf>, %75, %cst_22 [0] : vector<2x1xf32> to vector<1xf32>
    %77 = vector.shape_cast %76 : vector<1xf32> to vector<1x1xf32>
    %78 = vector.broadcast %77 : vector<1x1xf32> to vector<2x1xf32>
    %79 = arith.subf %75, %78 : vector<2x1xf32>
    %80 = math.exp %79 : vector<2x1xf32>
    %cst_23 = arith.constant dense<0.000000e+00> : vector<1xf32>
    %81 = vector.multi_reduction <add>, %80, %cst_23 [0] : vector<2x1xf32> to vector<1xf32>
    %82 = vector.shape_cast %81 : vector<1xf32> to vector<1x1xf32>
    %83 = vector.broadcast %82 : vector<1x1xf32> to vector<2x1xf32>
    %84 = arith.divf %80, %83 : vector<2x1xf32>
    %85 = vector.broadcast %84 : vector<2x1xf32> to vector<2x32xf32>
    %86 = arith.mulf %85, %68 : vector<2x32xf32>
    %cst_24 = arith.constant dense<0.000000e+00> : vector<32xf32>
    %87 = vector.multi_reduction <add>, %86, %cst_24 [0] : vector<2x32xf32> to vector<32xf32>
    %88 = vector.shape_cast %87 : vector<32xf32> to vector<1x32xf32>
    %89 = vector.extract_strided_slice %5 {offsets = [4, 0], sizes = [2, 128], strides = [1, 1]} : vector<16x128xf32> to vector<2x128xf32>
    %cst_25 = arith.constant dense<0.000000e+00> : vector<2x128xf32>
    %90 = tpu.matmul %68, %6, %cst_25 {dimension_numbers = #tpu.dot_dimension_numbers<[1], [0], [0], [1], [0, 0, 1, 1], [], []>} : vector<2x32xf32>, vector<32x128xf32>, vector<2x128xf32> -> vector<2x128xf32>
    %91 = arith.addf %89, %90 : vector<2x128xf32>
    %92 = vector.extract_strided_slice %91 {offsets = [0, 0], sizes = [2, 96], strides = [1, 1]} : vector<2x128xf32> to vector<2x96xf32>
    %93 = arith.negf %92 : vector<2x96xf32>
    %94 = math.exp %93 : vector<2x96xf32>
    %cst_26 = arith.constant 1.000000e+00 : f32
    %95 = vector.broadcast %cst_26 : f32 to vector<2x96xf32>
    %96 = arith.addf %95, %94 : vector<2x96xf32>
    %97 = arith.divf %95, %96 : vector<2x96xf32>
    %98 = vector.extract_strided_slice %91 {offsets = [0, 96], sizes = [2, 32], strides = [1, 1]} : vector<2x128xf32> to vector<2x32xf32>
    %99 = math.tanh %98 : vector<2x32xf32>
    %100 = vector.extract_strided_slice %97 {offsets = [0, 0], sizes = [2, 32], strides = [1, 1]} : vector<2x96xf32> to vector<2x32xf32>
    %101 = vector.extract_strided_slice %97 {offsets = [0, 32], sizes = [2, 32], strides = [1, 1]} : vector<2x96xf32> to vector<2x32xf32>
    %102 = vector.extract_strided_slice %97 {offsets = [0, 64], sizes = [2, 32], strides = [1, 1]} : vector<2x96xf32> to vector<2x32xf32>
    %103 = arith.mulf %101, %66 : vector<2x32xf32>
    %104 = arith.mulf %100, %99 : vector<2x32xf32>
    %105 = arith.addf %103, %104 : vector<2x32xf32>
    %106 = math.tanh %105 : vector<2x32xf32>
    %107 = arith.mulf %102, %106 : vector<2x32xf32>
    %108 = vector.broadcast %7 : vector<1x32xf32> to vector<2x32xf32>
    %109 = arith.mulf %107, %108 : vector<2x32xf32>
    %cst_27 = arith.constant dense<0.000000e+00> : vector<2xf32>
    %110 = vector.multi_reduction <add>, %109, %cst_27 [1] : vector<2x32xf32> to vector<2xf32>
    %111 = vector.shape_cast %110 : vector<2xf32> to vector<2x1xf32>
    %112 = vector.broadcast %8 : vector<1x1xf32> to vector<2x1xf32>
    %113 = arith.addf %111, %112 : vector<2x1xf32>
    %114 = math.tanh %113 : vector<2x1xf32>
    %cst_28 = arith.constant dense<0xFF800000> : vector<1xf32>
    %115 = vector.multi_reduction <maximumf>, %114, %cst_28 [0] : vector<2x1xf32> to vector<1xf32>
    %116 = vector.shape_cast %115 : vector<1xf32> to vector<1x1xf32>
    %117 = vector.broadcast %116 : vector<1x1xf32> to vector<2x1xf32>
    %118 = arith.subf %114, %117 : vector<2x1xf32>
    %119 = math.exp %118 : vector<2x1xf32>
    %cst_29 = arith.constant dense<0.000000e+00> : vector<1xf32>
    %120 = vector.multi_reduction <add>, %119, %cst_29 [0] : vector<2x1xf32> to vector<1xf32>
    %121 = vector.shape_cast %120 : vector<1xf32> to vector<1x1xf32>
    %122 = vector.broadcast %121 : vector<1x1xf32> to vector<2x1xf32>
    %123 = arith.divf %119, %122 : vector<2x1xf32>
    %124 = vector.broadcast %123 : vector<2x1xf32> to vector<2x32xf32>
    %125 = arith.mulf %124, %107 : vector<2x32xf32>
    %cst_30 = arith.constant dense<0.000000e+00> : vector<32xf32>
    %126 = vector.multi_reduction <add>, %125, %cst_30 [0] : vector<2x32xf32> to vector<32xf32>
    %127 = vector.shape_cast %126 : vector<32xf32> to vector<1x32xf32>
    %128 = vector.extract_strided_slice %5 {offsets = [6, 0], sizes = [2, 128], strides = [1, 1]} : vector<16x128xf32> to vector<2x128xf32>
    %cst_31 = arith.constant dense<0.000000e+00> : vector<2x128xf32>
    %129 = tpu.matmul %107, %6, %cst_31 {dimension_numbers = #tpu.dot_dimension_numbers<[1], [0], [0], [1], [0, 0, 1, 1], [], []>} : vector<2x32xf32>, vector<32x128xf32>, vector<2x128xf32> -> vector<2x128xf32>
    %130 = arith.addf %128, %129 : vector<2x128xf32>
    %131 = vector.extract_strided_slice %130 {offsets = [0, 0], sizes = [2, 96], strides = [1, 1]} : vector<2x128xf32> to vector<2x96xf32>
    %132 = arith.negf %131 : vector<2x96xf32>
    %133 = math.exp %132 : vector<2x96xf32>
    %cst_32 = arith.constant 1.000000e+00 : f32
    %134 = vector.broadcast %cst_32 : f32 to vector<2x96xf32>
    %135 = arith.addf %134, %133 : vector<2x96xf32>
    %136 = arith.divf %134, %135 : vector<2x96xf32>
    %137 = vector.extract_strided_slice %130 {offsets = [0, 96], sizes = [2, 32], strides = [1, 1]} : vector<2x128xf32> to vector<2x32xf32>
    %138 = math.tanh %137 : vector<2x32xf32>
    %139 = vector.extract_strided_slice %136 {offsets = [0, 0], sizes = [2, 32], strides = [1, 1]} : vector<2x96xf32> to vector<2x32xf32>
    %140 = vector.extract_strided_slice %136 {offsets = [0, 32], sizes = [2, 32], strides = [1, 1]} : vector<2x96xf32> to vector<2x32xf32>
    %141 = vector.extract_strided_slice %136 {offsets = [0, 64], sizes = [2, 32], strides = [1, 1]} : vector<2x96xf32> to vector<2x32xf32>
    %142 = arith.mulf %140, %105 : vector<2x32xf32>
    %143 = arith.mulf %139, %138 : vector<2x32xf32>
    %144 = arith.addf %142, %143 : vector<2x32xf32>
    %145 = math.tanh %144 : vector<2x32xf32>
    %146 = arith.mulf %141, %145 : vector<2x32xf32>
    %147 = vector.broadcast %7 : vector<1x32xf32> to vector<2x32xf32>
    %148 = arith.mulf %146, %147 : vector<2x32xf32>
    %cst_33 = arith.constant dense<0.000000e+00> : vector<2xf32>
    %149 = vector.multi_reduction <add>, %148, %cst_33 [1] : vector<2x32xf32> to vector<2xf32>
    %150 = vector.shape_cast %149 : vector<2xf32> to vector<2x1xf32>
    %151 = vector.broadcast %8 : vector<1x1xf32> to vector<2x1xf32>
    %152 = arith.addf %150, %151 : vector<2x1xf32>
    %153 = math.tanh %152 : vector<2x1xf32>
    %cst_34 = arith.constant dense<0xFF800000> : vector<1xf32>
    %154 = vector.multi_reduction <maximumf>, %153, %cst_34 [0] : vector<2x1xf32> to vector<1xf32>
    %155 = vector.shape_cast %154 : vector<1xf32> to vector<1x1xf32>
    %156 = vector.broadcast %155 : vector<1x1xf32> to vector<2x1xf32>
    %157 = arith.subf %153, %156 : vector<2x1xf32>
    %158 = math.exp %157 : vector<2x1xf32>
    %cst_35 = arith.constant dense<0.000000e+00> : vector<1xf32>
    %159 = vector.multi_reduction <add>, %158, %cst_35 [0] : vector<2x1xf32> to vector<1xf32>
    %160 = vector.shape_cast %159 : vector<1xf32> to vector<1x1xf32>
    %161 = vector.broadcast %160 : vector<1x1xf32> to vector<2x1xf32>
    %162 = arith.divf %158, %161 : vector<2x1xf32>
    %163 = vector.broadcast %162 : vector<2x1xf32> to vector<2x32xf32>
    %164 = arith.mulf %163, %146 : vector<2x32xf32>
    %cst_36 = arith.constant dense<0.000000e+00> : vector<32xf32>
    %165 = vector.multi_reduction <add>, %164, %cst_36 [0] : vector<2x32xf32> to vector<32xf32>
    %166 = vector.shape_cast %165 : vector<32xf32> to vector<1x32xf32>
    %167 = vector.extract_strided_slice %5 {offsets = [8, 0], sizes = [2, 128], strides = [1, 1]} : vector<16x128xf32> to vector<2x128xf32>
    %cst_37 = arith.constant dense<0.000000e+00> : vector<2x128xf32>
    %168 = tpu.matmul %146, %6, %cst_37 {dimension_numbers = #tpu.dot_dimension_numbers<[1], [0], [0], [1], [0, 0, 1, 1], [], []>} : vector<2x32xf32>, vector<32x128xf32>, vector<2x128xf32> -> vector<2x128xf32>
    %169 = arith.addf %167, %168 : vector<2x128xf32>
    %170 = vector.extract_strided_slice %169 {offsets = [0, 0], sizes = [2, 96], strides = [1, 1]} : vector<2x128xf32> to vector<2x96xf32>
    %171 = arith.negf %170 : vector<2x96xf32>
    %172 = math.exp %171 : vector<2x96xf32>
    %cst_38 = arith.constant 1.000000e+00 : f32
    %173 = vector.broadcast %cst_38 : f32 to vector<2x96xf32>
    %174 = arith.addf %173, %172 : vector<2x96xf32>
    %175 = arith.divf %173, %174 : vector<2x96xf32>
    %176 = vector.extract_strided_slice %169 {offsets = [0, 96], sizes = [2, 32], strides = [1, 1]} : vector<2x128xf32> to vector<2x32xf32>
    %177 = math.tanh %176 : vector<2x32xf32>
    %178 = vector.extract_strided_slice %175 {offsets = [0, 0], sizes = [2, 32], strides = [1, 1]} : vector<2x96xf32> to vector<2x32xf32>
    %179 = vector.extract_strided_slice %175 {offsets = [0, 32], sizes = [2, 32], strides = [1, 1]} : vector<2x96xf32> to vector<2x32xf32>
    %180 = vector.extract_strided_slice %175 {offsets = [0, 64], sizes = [2, 32], strides = [1, 1]} : vector<2x96xf32> to vector<2x32xf32>
    %181 = arith.mulf %179, %144 : vector<2x32xf32>
    %182 = arith.mulf %178, %177 : vector<2x32xf32>
    %183 = arith.addf %181, %182 : vector<2x32xf32>
    %184 = math.tanh %183 : vector<2x32xf32>
    %185 = arith.mulf %180, %184 : vector<2x32xf32>
    %186 = vector.broadcast %7 : vector<1x32xf32> to vector<2x32xf32>
    %187 = arith.mulf %185, %186 : vector<2x32xf32>
    %cst_39 = arith.constant dense<0.000000e+00> : vector<2xf32>
    %188 = vector.multi_reduction <add>, %187, %cst_39 [1] : vector<2x32xf32> to vector<2xf32>
    %189 = vector.shape_cast %188 : vector<2xf32> to vector<2x1xf32>
    %190 = vector.broadcast %8 : vector<1x1xf32> to vector<2x1xf32>
    %191 = arith.addf %189, %190 : vector<2x1xf32>
    %192 = math.tanh %191 : vector<2x1xf32>
    %cst_40 = arith.constant dense<0xFF800000> : vector<1xf32>
    %193 = vector.multi_reduction <maximumf>, %192, %cst_40 [0] : vector<2x1xf32> to vector<1xf32>
    %194 = vector.shape_cast %193 : vector<1xf32> to vector<1x1xf32>
    %195 = vector.broadcast %194 : vector<1x1xf32> to vector<2x1xf32>
    %196 = arith.subf %192, %195 : vector<2x1xf32>
    %197 = math.exp %196 : vector<2x1xf32>
    %cst_41 = arith.constant dense<0.000000e+00> : vector<1xf32>
    %198 = vector.multi_reduction <add>, %197, %cst_41 [0] : vector<2x1xf32> to vector<1xf32>
    %199 = vector.shape_cast %198 : vector<1xf32> to vector<1x1xf32>
    %200 = vector.broadcast %199 : vector<1x1xf32> to vector<2x1xf32>
    %201 = arith.divf %197, %200 : vector<2x1xf32>
    %202 = vector.broadcast %201 : vector<2x1xf32> to vector<2x32xf32>
    %203 = arith.mulf %202, %185 : vector<2x32xf32>
    %cst_42 = arith.constant dense<0.000000e+00> : vector<32xf32>
    %204 = vector.multi_reduction <add>, %203, %cst_42 [0] : vector<2x32xf32> to vector<32xf32>
    %205 = vector.shape_cast %204 : vector<32xf32> to vector<1x32xf32>
    %206 = vector.extract_strided_slice %5 {offsets = [10, 0], sizes = [2, 128], strides = [1, 1]} : vector<16x128xf32> to vector<2x128xf32>
    %cst_43 = arith.constant dense<0.000000e+00> : vector<2x128xf32>
    %207 = tpu.matmul %185, %6, %cst_43 {dimension_numbers = #tpu.dot_dimension_numbers<[1], [0], [0], [1], [0, 0, 1, 1], [], []>} : vector<2x32xf32>, vector<32x128xf32>, vector<2x128xf32> -> vector<2x128xf32>
    %208 = arith.addf %206, %207 : vector<2x128xf32>
    %209 = vector.extract_strided_slice %208 {offsets = [0, 0], sizes = [2, 96], strides = [1, 1]} : vector<2x128xf32> to vector<2x96xf32>
    %210 = arith.negf %209 : vector<2x96xf32>
    %211 = math.exp %210 : vector<2x96xf32>
    %cst_44 = arith.constant 1.000000e+00 : f32
    %212 = vector.broadcast %cst_44 : f32 to vector<2x96xf32>
    %213 = arith.addf %212, %211 : vector<2x96xf32>
    %214 = arith.divf %212, %213 : vector<2x96xf32>
    %215 = vector.extract_strided_slice %208 {offsets = [0, 96], sizes = [2, 32], strides = [1, 1]} : vector<2x128xf32> to vector<2x32xf32>
    %216 = math.tanh %215 : vector<2x32xf32>
    %217 = vector.extract_strided_slice %214 {offsets = [0, 0], sizes = [2, 32], strides = [1, 1]} : vector<2x96xf32> to vector<2x32xf32>
    %218 = vector.extract_strided_slice %214 {offsets = [0, 32], sizes = [2, 32], strides = [1, 1]} : vector<2x96xf32> to vector<2x32xf32>
    %219 = vector.extract_strided_slice %214 {offsets = [0, 64], sizes = [2, 32], strides = [1, 1]} : vector<2x96xf32> to vector<2x32xf32>
    %220 = arith.mulf %218, %183 : vector<2x32xf32>
    %221 = arith.mulf %217, %216 : vector<2x32xf32>
    %222 = arith.addf %220, %221 : vector<2x32xf32>
    %223 = math.tanh %222 : vector<2x32xf32>
    %224 = arith.mulf %219, %223 : vector<2x32xf32>
    %225 = vector.broadcast %7 : vector<1x32xf32> to vector<2x32xf32>
    %226 = arith.mulf %224, %225 : vector<2x32xf32>
    %cst_45 = arith.constant dense<0.000000e+00> : vector<2xf32>
    %227 = vector.multi_reduction <add>, %226, %cst_45 [1] : vector<2x32xf32> to vector<2xf32>
    %228 = vector.shape_cast %227 : vector<2xf32> to vector<2x1xf32>
    %229 = vector.broadcast %8 : vector<1x1xf32> to vector<2x1xf32>
    %230 = arith.addf %228, %229 : vector<2x1xf32>
    %231 = math.tanh %230 : vector<2x1xf32>
    %cst_46 = arith.constant dense<0xFF800000> : vector<1xf32>
    %232 = vector.multi_reduction <maximumf>, %231, %cst_46 [0] : vector<2x1xf32> to vector<1xf32>
    %233 = vector.shape_cast %232 : vector<1xf32> to vector<1x1xf32>
    %234 = vector.broadcast %233 : vector<1x1xf32> to vector<2x1xf32>
    %235 = arith.subf %231, %234 : vector<2x1xf32>
    %236 = math.exp %235 : vector<2x1xf32>
    %cst_47 = arith.constant dense<0.000000e+00> : vector<1xf32>
    %237 = vector.multi_reduction <add>, %236, %cst_47 [0] : vector<2x1xf32> to vector<1xf32>
    %238 = vector.shape_cast %237 : vector<1xf32> to vector<1x1xf32>
    %239 = vector.broadcast %238 : vector<1x1xf32> to vector<2x1xf32>
    %240 = arith.divf %236, %239 : vector<2x1xf32>
    %241 = vector.broadcast %240 : vector<2x1xf32> to vector<2x32xf32>
    %242 = arith.mulf %241, %224 : vector<2x32xf32>
    %cst_48 = arith.constant dense<0.000000e+00> : vector<32xf32>
    %243 = vector.multi_reduction <add>, %242, %cst_48 [0] : vector<2x32xf32> to vector<32xf32>
    %244 = vector.shape_cast %243 : vector<32xf32> to vector<1x32xf32>
    %245 = vector.extract_strided_slice %5 {offsets = [12, 0], sizes = [2, 128], strides = [1, 1]} : vector<16x128xf32> to vector<2x128xf32>
    %cst_49 = arith.constant dense<0.000000e+00> : vector<2x128xf32>
    %246 = tpu.matmul %224, %6, %cst_49 {dimension_numbers = #tpu.dot_dimension_numbers<[1], [0], [0], [1], [0, 0, 1, 1], [], []>} : vector<2x32xf32>, vector<32x128xf32>, vector<2x128xf32> -> vector<2x128xf32>
    %247 = arith.addf %245, %246 : vector<2x128xf32>
    %248 = vector.extract_strided_slice %247 {offsets = [0, 0], sizes = [2, 96], strides = [1, 1]} : vector<2x128xf32> to vector<2x96xf32>
    %249 = arith.negf %248 : vector<2x96xf32>
    %250 = math.exp %249 : vector<2x96xf32>
    %cst_50 = arith.constant 1.000000e+00 : f32
    %251 = vector.broadcast %cst_50 : f32 to vector<2x96xf32>
    %252 = arith.addf %251, %250 : vector<2x96xf32>
    %253 = arith.divf %251, %252 : vector<2x96xf32>
    %254 = vector.extract_strided_slice %247 {offsets = [0, 96], sizes = [2, 32], strides = [1, 1]} : vector<2x128xf32> to vector<2x32xf32>
    %255 = math.tanh %254 : vector<2x32xf32>
    %256 = vector.extract_strided_slice %253 {offsets = [0, 0], sizes = [2, 32], strides = [1, 1]} : vector<2x96xf32> to vector<2x32xf32>
    %257 = vector.extract_strided_slice %253 {offsets = [0, 32], sizes = [2, 32], strides = [1, 1]} : vector<2x96xf32> to vector<2x32xf32>
    %258 = vector.extract_strided_slice %253 {offsets = [0, 64], sizes = [2, 32], strides = [1, 1]} : vector<2x96xf32> to vector<2x32xf32>
    %259 = arith.mulf %257, %222 : vector<2x32xf32>
    %260 = arith.mulf %256, %255 : vector<2x32xf32>
    %261 = arith.addf %259, %260 : vector<2x32xf32>
    %262 = math.tanh %261 : vector<2x32xf32>
    %263 = arith.mulf %258, %262 : vector<2x32xf32>
    %264 = vector.broadcast %7 : vector<1x32xf32> to vector<2x32xf32>
    %265 = arith.mulf %263, %264 : vector<2x32xf32>
    %cst_51 = arith.constant dense<0.000000e+00> : vector<2xf32>
    %266 = vector.multi_reduction <add>, %265, %cst_51 [1] : vector<2x32xf32> to vector<2xf32>
    %267 = vector.shape_cast %266 : vector<2xf32> to vector<2x1xf32>
    %268 = vector.broadcast %8 : vector<1x1xf32> to vector<2x1xf32>
    %269 = arith.addf %267, %268 : vector<2x1xf32>
    %270 = math.tanh %269 : vector<2x1xf32>
    %cst_52 = arith.constant dense<0xFF800000> : vector<1xf32>
    %271 = vector.multi_reduction <maximumf>, %270, %cst_52 [0] : vector<2x1xf32> to vector<1xf32>
    %272 = vector.shape_cast %271 : vector<1xf32> to vector<1x1xf32>
    %273 = vector.broadcast %272 : vector<1x1xf32> to vector<2x1xf32>
    %274 = arith.subf %270, %273 : vector<2x1xf32>
    %275 = math.exp %274 : vector<2x1xf32>
    %cst_53 = arith.constant dense<0.000000e+00> : vector<1xf32>
    %276 = vector.multi_reduction <add>, %275, %cst_53 [0] : vector<2x1xf32> to vector<1xf32>
    %277 = vector.shape_cast %276 : vector<1xf32> to vector<1x1xf32>
    %278 = vector.broadcast %277 : vector<1x1xf32> to vector<2x1xf32>
    %279 = arith.divf %275, %278 : vector<2x1xf32>
    %280 = vector.broadcast %279 : vector<2x1xf32> to vector<2x32xf32>
    %281 = arith.mulf %280, %263 : vector<2x32xf32>
    %cst_54 = arith.constant dense<0.000000e+00> : vector<32xf32>
    %282 = vector.multi_reduction <add>, %281, %cst_54 [0] : vector<2x32xf32> to vector<32xf32>
    %283 = vector.shape_cast %282 : vector<32xf32> to vector<1x32xf32>
    %284 = vector.extract_strided_slice %5 {offsets = [14, 0], sizes = [2, 128], strides = [1, 1]} : vector<16x128xf32> to vector<2x128xf32>
    %cst_55 = arith.constant dense<0.000000e+00> : vector<2x128xf32>
    %285 = tpu.matmul %263, %6, %cst_55 {dimension_numbers = #tpu.dot_dimension_numbers<[1], [0], [0], [1], [0, 0, 1, 1], [], []>} : vector<2x32xf32>, vector<32x128xf32>, vector<2x128xf32> -> vector<2x128xf32>
    %286 = arith.addf %284, %285 : vector<2x128xf32>
    %287 = vector.extract_strided_slice %286 {offsets = [0, 0], sizes = [2, 96], strides = [1, 1]} : vector<2x128xf32> to vector<2x96xf32>
    %288 = arith.negf %287 : vector<2x96xf32>
    %289 = math.exp %288 : vector<2x96xf32>
    %cst_56 = arith.constant 1.000000e+00 : f32
    %290 = vector.broadcast %cst_56 : f32 to vector<2x96xf32>
    %291 = arith.addf %290, %289 : vector<2x96xf32>
    %292 = arith.divf %290, %291 : vector<2x96xf32>
    %293 = vector.extract_strided_slice %286 {offsets = [0, 96], sizes = [2, 32], strides = [1, 1]} : vector<2x128xf32> to vector<2x32xf32>
    %294 = math.tanh %293 : vector<2x32xf32>
    %295 = vector.extract_strided_slice %292 {offsets = [0, 0], sizes = [2, 32], strides = [1, 1]} : vector<2x96xf32> to vector<2x32xf32>
    %296 = vector.extract_strided_slice %292 {offsets = [0, 32], sizes = [2, 32], strides = [1, 1]} : vector<2x96xf32> to vector<2x32xf32>
    %297 = vector.extract_strided_slice %292 {offsets = [0, 64], sizes = [2, 32], strides = [1, 1]} : vector<2x96xf32> to vector<2x32xf32>
    %298 = arith.mulf %296, %261 : vector<2x32xf32>
    %299 = arith.mulf %295, %294 : vector<2x32xf32>
    %300 = arith.addf %298, %299 : vector<2x32xf32>
    %301 = math.tanh %300 : vector<2x32xf32>
    %302 = arith.mulf %297, %301 : vector<2x32xf32>
    %303 = vector.broadcast %7 : vector<1x32xf32> to vector<2x32xf32>
    %304 = arith.mulf %302, %303 : vector<2x32xf32>
    %cst_57 = arith.constant dense<0.000000e+00> : vector<2xf32>
    %305 = vector.multi_reduction <add>, %304, %cst_57 [1] : vector<2x32xf32> to vector<2xf32>
    %306 = vector.shape_cast %305 : vector<2xf32> to vector<2x1xf32>
    %307 = vector.broadcast %8 : vector<1x1xf32> to vector<2x1xf32>
    %308 = arith.addf %306, %307 : vector<2x1xf32>
    %309 = math.tanh %308 : vector<2x1xf32>
    %cst_58 = arith.constant dense<0xFF800000> : vector<1xf32>
    %310 = vector.multi_reduction <maximumf>, %309, %cst_58 [0] : vector<2x1xf32> to vector<1xf32>
    %311 = vector.shape_cast %310 : vector<1xf32> to vector<1x1xf32>
    %312 = vector.broadcast %311 : vector<1x1xf32> to vector<2x1xf32>
    %313 = arith.subf %309, %312 : vector<2x1xf32>
    %314 = math.exp %313 : vector<2x1xf32>
    %cst_59 = arith.constant dense<0.000000e+00> : vector<1xf32>
    %315 = vector.multi_reduction <add>, %314, %cst_59 [0] : vector<2x1xf32> to vector<1xf32>
    %316 = vector.shape_cast %315 : vector<1xf32> to vector<1x1xf32>
    %317 = vector.broadcast %316 : vector<1x1xf32> to vector<2x1xf32>
    %318 = arith.divf %314, %317 : vector<2x1xf32>
    %319 = vector.broadcast %318 : vector<2x1xf32> to vector<2x32xf32>
    %320 = arith.mulf %319, %302 : vector<2x32xf32>
    %cst_60 = arith.constant dense<0.000000e+00> : vector<32xf32>
    %321 = vector.multi_reduction <add>, %320, %cst_60 [0] : vector<2x32xf32> to vector<32xf32>
    %322 = vector.shape_cast %321 : vector<32xf32> to vector<1x32xf32>
    %323 = tpu.concatenate %49, %88, %127, %166, %205, %244, %283, %322 in 0 : vector<1x32xf32>, vector<1x32xf32>, vector<1x32xf32>, vector<1x32xf32>, vector<1x32xf32>, vector<1x32xf32>, vector<1x32xf32>, vector<1x32xf32> -> vector<8x32xf32>
    %c0_61 = arith.constant 0 : index
    %c0_62 = arith.constant 0 : index
    %324 = vector.load %arg6[%c0_61, %c0_62] : memref<8x32xf32, #tpu.memory_space<vmem>>, vector<8x32xf32>
    tpu.vector_store %arg6[%c0_61, %c0_62], %323 {strides = array<i32>} : memref<8x32xf32, #tpu.memory_space<vmem>>, vector<8x32xf32>,
    return
  }
}

</mosaic_0001>

<llo_original>
// kernel: tpu_custom_call.1
$region0: #{tpu_custom_call.1}
  #allocation0 [shape = 'u32[]', space=smem, size = 0x4, offset = 0x4, fixed_abs, tag = 'smem constant byte address 0x4 - core index']
  #allocation1 [shape = 'u32[144,128]{1,0:T(1,128)}', space=vmem, size = 0x12000, scoped, tag = 'internal scratch']
  #allocation2 [shape = 'f32[1,1]{1,0:T(1,128)S(1)}', space=vmem, size = 0x200, scoped, tag = 'scoped memory for tpu_custom_call.1']
  %s0 = inlined_call_operand.hbm [shape: f32[16,32], index: 0, kind: input, shape index: {}]
  %s1 = inlined_call_operand.hbm [shape: f32[32,128], index: 1, kind: input, shape index: {}]
  %s2 = inlined_call_operand.hbm [shape: f32[32,128], index: 2, kind: input, shape index: {}]
  %s3 = inlined_call_operand.vmem [shape: f32[1,128], index: 3, kind: input, shape index: {}]
  %s4 = inlined_call_operand.vmem [shape: f32[1,32], index: 4, kind: input, shape index: {}]
  %s5 = inlined_call_operand.<no memory space> [shape: f32[1,1], index: 5, kind: input, shape index: {}]
  %s6 = inlined_call_operand.hbm [shape: f32[8,32], index: 6, kind: output, shape index: {}]
  %s7 = sld [smem:[#allocation0]]
  $region46: #{tpu_custom_call.1} parent=0
    _
  %s9 = ssub.s32 1, %s7
  %s10 = scalar_select 0, %s9, %s7
  %v11 = vstv %s5
  %12 = vst [vmem:[#allocation2] sm:$0x1] %v11
  $region1: #{tpu_custom_call.1} parent=0
    #allocation3 [shape = 'u8[8192]{0}', space=vmem, size = 0x2000, scoped, tag = 'input window, operand 0, single buffered']
    #allocation4 [shape = 's32[1]{0}', space=sflag, size = 0x4, scoped, tag = 'scoped memory for tpu_custom_call.1']
    #allocation5 [shape = 's32[1]{0}', space=sflag, size = 0x4, scoped, tag = 'scoped memory for tpu_custom_call.1']
    #allocation6 [shape = 'u8[16384]{0}', space=vmem, size = 0x4000, scoped, tag = 'input window, operand 1, single buffered']
    #allocation7 [shape = 's32[1]{0}', space=sflag, size = 0x4, scoped, tag = 'scoped memory for tpu_custom_call.1']
    #allocation8 [shape = 'u8[16384]{0}', space=vmem, size = 0x4000, scoped, tag = 'input window, operand 2, single buffered']
    #allocation9 [shape = 'u8[4096]{0}', space=vmem, size = 0x1000, scoped, tag = 'output window, operand 0, single buffered']
    %13 = vsyncpa [#allocation4], 0
    %14 = vsyncpa [#allocation7], 0
    %15 = vsyncpa [#allocation5], 0
    // Predicated region
    $region2: #{tpu_custom_call.1} parent=1 // pred_check
      _
    $region3: #{tpu_custom_call.1} parent=1 // pred_check_branch
      %17 = sbr.rel (0) target = $region5
    $region4: #{tpu_custom_call.1} parent=1 // pred_region
      %s19 = ssub.s32 256, 256
      %20 = vsyncadd [#allocation4], %s19
      %s21 = sshll.u32 [#allocation3], 4
      %s22 = int_to_ptr.vmem [resolvable:$true] %s21
      %27 = dma.hbm_to_vmem [thread:$0]  %s0, 256, %s22, [#allocation4], 128, 128, 8
    $region5: #{tpu_custom_call.1} parent=1 // pred_fallthru
      _
    // Predicated region
    $region6: #{tpu_custom_call.1} parent=1 // pred_check
      _
    $region7: #{tpu_custom_call.1} parent=1 // pred_check_branch
      %29 = sbr.rel (0) target = $region9
    $region8: #{tpu_custom_call.1} parent=1 // pred_region
      %s31 = ssub.s32 512, 512
      %32 = vsyncadd [#allocation7], %s31
      %s33 = sshll.u32 [#allocation6], 4
      %s34 = int_to_ptr.vmem [resolvable:$true] %s33
      %39 = dma.hbm_to_vmem [thread:$0]  %s1, 512, %s34, [#allocation7], 128, 128, 8
    $region9: #{tpu_custom_call.1} parent=1 // pred_fallthru
      _
    // Predicated region
    $region10: #{tpu_custom_call.1} parent=1 // pred_check
      _
    $region11: #{tpu_custom_call.1} parent=1 // pred_check_branch
      %41 = sbr.rel (0) target = $region13
    $region12: #{tpu_custom_call.1} parent=1 // pred_region
      %s43 = ssub.s32 512, 512
      %44 = vsyncadd [#allocation7], %s43
      %s45 = sshll.u32 [#allocation8], 4
      %s46 = int_to_ptr.vmem [resolvable:$true] %s45
      %51 = dma.hbm_to_vmem [thread:$0]  %s2, 512, %s46, [#allocation7], 128, 128, 8
    $region13: #{tpu_custom_call.1} parent=1 // pred_fallthru
      _
    // Predicated region
    $region14: #{tpu_custom_call.1} parent=1 // pred_check
      _
    $region15: #{tpu_custom_call.1} parent=1 // pred_check_branch
      %53 = sbr.rel (0) target = $region17
    $region16: #{tpu_custom_call.1} parent=1 // pred_region
      _
    $region17: #{tpu_custom_call.1} parent=1 // pred_fallthru
      _
    // Predicated region
    $region18: #{tpu_custom_call.1} parent=1 // pred_check
      _
    $region19: #{tpu_custom_call.1} parent=1 // pred_check_branch
      %55 = sbr.rel (0) target = $region21
    $region20: #{tpu_custom_call.1} parent=1 // pred_region
      _
    $region21: #{tpu_custom_call.1} parent=1 // pred_fallthru
      _
    // Predicated region
    $region22: #{tpu_custom_call.1} parent=1 // pred_check
      _
    $region23: #{tpu_custom_call.1} parent=1 // pred_check_branch
      %57 = sbr.rel (0) target = $region25
    $region24: #{tpu_custom_call.1} parent=1 // pred_region
      _
    $region25: #{tpu_custom_call.1} parent=1 // pred_fallthru
      _
    // Predicated region
    $region26: #{tpu_custom_call.1} parent=1 // pred_check
      _
    $region27: #{tpu_custom_call.1} parent=1 // pred_check_branch
      %59 = sbr.rel (0) target = $region29
    $region28: #{tpu_custom_call.1} parent=1 // pred_region
      %60 = dma.done [#allocation4], 256
    $region29: #{tpu_custom_call.1} parent=1 // pred_fallthru
      _
    // Predicated region
    $region30: #{tpu_custom_call.1} parent=1 // pred_check
      _
    $region31: #{tpu_custom_call.1} parent=1 // pred_check_branch
      %62 = sbr.rel (0) target = $region33
    $region32: #{tpu_custom_call.1} parent=1 // pred_region
      %63 = dma.done [#allocation7], 512
    $region33: #{tpu_custom_call.1} parent=1 // pred_fallthru
      _
    // Predicated region
    $region34: #{tpu_custom_call.1} parent=1 // pred_check
      _
    $region35: #{tpu_custom_call.1} parent=1 // pred_check_branch
      %65 = sbr.rel (0) target = $region37
    $region36: #{tpu_custom_call.1} parent=1 // pred_region
      %66 = dma.done [#allocation7], 512
    $region37: #{tpu_custom_call.1} parent=1 // pred_fallthru
      _
    %v67 = vld [vmem:[#allocation3] sm:$0xff]
    %v68 = vld [vmem:[#allocation3 + $0x8] sm:$0xff]
    %v69 = vld [vmem:[#allocation6] sm:$0xff]
    %v70 = vld [vmem:[#allocation6 + $0x8] sm:$0xff]
    %v71 = vld [vmem:[#allocation6 + $0x10] sm:$0xff]
    %v72 = vld [vmem:[#allocation6 + $0x18] sm:$0xff]
    %v73 = vld [vmem:[%s3] sm:$0x1]
    %v75 = vlaneseq
    %v76 = vshrl.u32 %v75, 7
    %v77 = vsub.s32 0, %v76
    %v78 = vrot.slane %v73, %v77
    %vm80 = vcmask 261120
    %v82 = vsel %vm80, %v67, 0
    %v85 = vsel %vm80, %v68, 0
    %87 = vmatprep.subr.mxu0 0.0
    %88 = vmatpush1.msra.mxu0 %v69
    %89 = vmatprep.subr.mxu0 0.0
    %90 = vmatpush1.msra.mxu0 %v70
    %91 = vmatprep.subr.mxu0 0.0
    %92 = vmatpush1.msra.mxu0 %v71
    %93 = vmatprep.subr.mxu0 0.0
    %94 = vmatpush1.msra.mxu0 %v72
    %95 = vmatprep.subr.mxu0 0.0
    %96 = vmatpush1.msra.mxu0 0.0
    %97 = vmatprep.subr.mxu0 0.0
    %98 = vmatpush1.msra.mxu0 0.0
    %99 = vmatprep.subr.mxu0 0.0
    %100 = vmatpush1.msra.mxu0 0.0
    %101 = vmatprep.subr.mxu0 0.0
    %102 = vmatpush1.msra.mxu0 0.0
    %103 = vmatprep.subr.mxu0 0.0
    %104 = vmatpush1.msra.mxu0 0.0
    %105 = vmatprep.subr.mxu0 0.0
    %106 = vmatpush1.msra.mxu0 0.0
    %107 = vmatprep.subr.mxu0 0.0
    %108 = vmatpush1.msra.mxu0 0.0
    %109 = vmatprep.subr.mxu0 0.0
    %110 = vmatpush1.msra.mxu0 0.0
    %111 = vmatprep.subr.mxu0 0.0
    %112 = vmatpush1.msra.mxu0 0.0
    %113 = vmatprep.subr.mxu0 0.0
    %114 = vmatpush1.msra.mxu0 0.0
    %115 = vmatprep.subr.mxu0 0.0
    %116 = vmatpush1.msra.mxu0 0.0
    %117 = vmatprep.subr.mxu0 0.0
    %118 = vmatpush1.msra.mxu0 0.0
    %119 = vmatprep.subr.mxu0 0.0
    %120 = vmatpush1.msra.mxu0 0.0
    %121 = vmatprep.subr.mxu0 0.0
    %122 = vmatpush1.msra.mxu0 0.0
    %123 = vmatprep.subr.mxu0 0.0
    %124 = vmatpush1.msra.mxu0 0.0
    %125 = vmatprep.subr.mxu0 0.0
    %126 = vmatpush1.msra.mxu0 0.0
    %127 = vmatprep.subr.mxu0 0.0
    %128 = vmatpush1.msra.mxu0 0.0
    %129 = vmatprep.subr.mxu0 0.0
    %130 = vmatpush1.msra.mxu0 0.0
    %131 = vmatprep.subr.mxu0 0.0
    %132 = vmatpush1.msra.mxu0 0.0
    %133 = vmatprep.subr.mxu0 0.0
    %134 = vmatpush1.msra.mxu0 0.0
    %135 = vmatprep.subr.mxu0 0.0
    %136 = vmatpush1.msra.mxu0 0.0
    %137 = vmatprep.subr.mxu0 0.0
    %138 = vmatpush1.msra.mxu0 0.0
    %139 = vmatprep.subr.mxu0 0.0
    %140 = vmatpush1.msra.mxu0 0.0
    %141 = vmatprep.subr.mxu0 0.0
    %142 = vmatpush1.msra.mxu0 0.0
    %143 = vmatprep.subr.mxu0 0.0
    %144 = vmatpush1.msra.mxu0 0.0
    %145 = vmatprep.subr.mxu0 0.0
    %146 = vmatpush1.msra.mxu0 0.0
    %147 = vmatprep.subr.mxu0 0.0
    %148 = vmatpush1.msra.mxu0 0.0
    %149 = vmatprep.subr.mxu0 0.0
    %150 = vmatpush1.msra.mxu0 0.0
    %151 = vmatprep.mubr.f32.mxu0 0.0
    %152 = vmatmul.mubr.f32.gmra.mrb[0].mxu0 %v82
    %v153 = vpop.f32.mrb[0].mxu0
    %v154 = vadd.f32 %v78, %v153
    %v155 = vpop.f32.mrb[0].mxu0
    %156 = vmatprep.mubr.f32.mxu0 0.0
    %157 = vmatmul.mubr.f32.gmra.mrb[0].mxu0 %v85
    %v158 = vpop.f32.mrb[0].mxu0
    %v159 = vadd.f32 %v78, %v158
    %v160 = vpop.f32.mrb[0].mxu0
    %161 = vdwg.mxu0
    %v162 = vld [vmem:[#allocation8] sm:$0xff]
    %v163 = vld [vmem:[#allocation8 + $0x8] sm:$0xff]
    %v164 = vld [vmem:[#allocation8 + $0x10] sm:$0xff]
    %v165 = vld [vmem:[#allocation8 + $0x18] sm:$0xff]
    %v166 = vld [vmem:[%s4] sm:$0x1]
    %v167 = vld [vmem:[#allocation2] sm:$0x1]
    %v169 = vsel %vm80, 0.0, 0
    %171 = vmatprep.subr.mxu0 0.0
    %172 = vmatpush1.msra.mxu0 %v162
    %173 = vmatprep.subr.mxu0 0.0
    %174 = vmatpush1.msra.mxu0 %v163
    %175 = vmatprep.subr.mxu0 0.0
    %176 = vmatpush1.msra.mxu0 %v164
    %177 = vmatprep.subr.mxu0 0.0
    %178 = vmatpush1.msra.mxu0 %v165
    %179 = vmatprep.subr.mxu0 0.0
    %180 = vmatpush1.msra.mxu0 0.0
    %181 = vmatprep.subr.mxu0 0.0
    %182 = vmatpush1.msra.mxu0 0.0
    %183 = vmatprep.subr.mxu0 0.0
    %184 = vmatpush1.msra.mxu0 0.0
    %185 = vmatprep.subr.mxu0 0.0
    %186 = vmatpush1.msra.mxu0 0.0
    %187 = vmatprep.subr.mxu0 0.0
    %188 = vmatpush1.msra.mxu0 0.0
    %189 = vmatprep.subr.mxu0 0.0
    %190 = vmatpush1.msra.mxu0 0.0
    %191 = vmatprep.subr.mxu0 0.0
    %192 = vmatpush1.msra.mxu0 0.0
    %193 = vmatprep.subr.mxu0 0.0
    %194 = vmatpush1.msra.mxu0 0.0
    %195 = vmatprep.subr.mxu0 0.0
    %196 = vmatpush1.msra.mxu0 0.0
    %197 = vmatprep.subr.mxu0 0.0
    %198 = vmatpush1.msra.mxu0 0.0
    %199 = vmatprep.subr.mxu0 0.0
    %200 = vmatpush1.msra.mxu0 0.0
    %201 = vmatprep.subr.mxu0 0.0
    %202 = vmatpush1.msra.mxu0 0.0
    %203 = vmatprep.subr.mxu0 0.0
    %204 = vmatpush1.msra.mxu0 0.0
    %205 = vmatprep.subr.mxu0 0.0
    %206 = vmatpush1.msra.mxu0 0.0
    %207 = vmatprep.subr.mxu0 0.0
    %208 = vmatpush1.msra.mxu0 0.0
    %209 = vmatprep.subr.mxu0 0.0
    %210 = vmatpush1.msra.mxu0 0.0
    %211 = vmatprep.subr.mxu0 0.0
    %212 = vmatpush1.msra.mxu0 0.0
    %213 = vmatprep.subr.mxu0 0.0
    %214 = vmatpush1.msra.mxu0 0.0
    %215 = vmatprep.subr.mxu0 0.0
    %216 = vmatpush1.msra.mxu0 0.0
    %217 = vmatprep.subr.mxu0 0.0
    %218 = vmatpush1.msra.mxu0 0.0
    %219 = vmatprep.subr.mxu0 0.0
    %220 = vmatpush1.msra.mxu0 0.0
    %221 = vmatprep.subr.mxu0 0.0
    %222 = vmatpush1.msra.mxu0 0.0
    %223 = vmatprep.subr.mxu0 0.0
    %224 = vmatpush1.msra.mxu0 0.0
    %225 = vmatprep.subr.mxu0 0.0
    %226 = vmatpush1.msra.mxu0 0.0
    %227 = vmatprep.subr.mxu0 0.0
    %228 = vmatpush1.msra.mxu0 0.0
    %229 = vmatprep.subr.mxu0 0.0
    %230 = vmatpush1.msra.mxu0 0.0
    %231 = vmatprep.subr.mxu0 0.0
    %232 = vmatpush1.msra.mxu0 0.0
    %233 = vmatprep.subr.mxu0 0.0
    %234 = vmatpush1.msra.mxu0 0.0
    %235 = vmatprep.mubr.f32.mxu0 0.0
    %236 = vmatmul.mubr.f32.gmra.mrb[0].mxu0 %v169
    %v237 = vpop.f32.mrb[0].mxu0
    %v238 = vadd.f32 0.0, %v237
    %v239 = vpop.f32.mrb[0].mxu0
    %240 = vdwg.mxu0
    %v241 = vadd.f32 %v154, %v238
    %v242 = vxor.u32 %v241, 2147483648
    %v243 = vmul.f32 %v242, 1.442695
    %v244 = vpow.pop %v243
    %v245 = vadd.f32 %v244, 1.0
    %v246 = vrcp.pop %v245
    %v247 = vmul.f32 1.0, %v246
    %v248 = vtanh.pop %v241
    %v249 = vmul.f32 %v247, 0.0
    %251 = vrot.lane.b32.xlu0 %v248, 32
    %v252 = vpop.permute.xlu0 %251
    %v254 = vmul.f32 %v247, %v252
    %256 = vrot.lane.b32.xlu0 %v254, 32
    %v257 = vpop.permute.xlu0 %256
    %v259 = vadd.f32 %v249, %v257
    %v260 = vtanh.pop %v259
    %262 = vrot.lane.b32.xlu0 %v260, 32
    %v263 = vpop.permute.xlu0 %262
    %v265 = vmul.f32 %v247, %v263
    %v267 = vlaneseq
    %v268 = vshrl.u32 %v267, 7
    %v269 = vsub.s32 0, %v268
    %v270 = vrot.slane %v166, %v269
    %271 = vrot.lane.b32.xlu0 %v270, 64
    %v272 = vpop.permute.xlu0 %271
    %v274 = vmul.f32 %v265, %v272
    %276 = vrot.lane.b32.xlu0 %v274, 64
    %v277 = vpop.permute.xlu0 %276
    %vm279 = vcmask 254976
    %v280 = vsel %vm279, %v277, 0.0
    %281 = vadd.xlane.f32.xlu0 %v280
    %v282 = vpop.xlane.xlu0 %281
    %v284 = vlaneseq
    %v285 = vshrl.u32 %v284, 7
    %v286 = vsub.s32 0, %v285
    %v287 = vrot.slane %v167, %v286
    %v289 = vadd.f32 %v282, %v287
    %v290 = vtanh.pop %v289
    %vm291 = vcmask 1024
    %v292 = vsel %vm291, %v290, -inf
    %v293 = vrot.slane %v292, 4
    %v294 = vmax.f32 %v292, %v293
    %v295 = vrot.slane %v294, 2
    %v296 = vmax.f32 %v294, %v295
    %v297 = vrot.slane %v296, 1
    %v298 = vmax.f32 %v296, %v297
    %v299 = vsub.f32 %v290, %v298
    %v300 = vmul.f32 %v299, 1.442695
    %v301 = vpow.pop %v300
    %v302 = vsel %vm291, %v301, 0.0
    %v303 = vrot.slane %v302, 4
    %v304 = vadd.f32 %v302, %v303
    %v305 = vrot.slane %v304, 2
    %v306 = vadd.f32 %v304, %v305
    %v307 = vrot.slane %v306, 1
    %v308 = vadd.f32 %v306, %v307
    %v309 = vrcp.pop %v308
    %v310 = vmul.f32 %v301, %v309
    %312 = vset.pattern.permute.xlu0 0
    %313 = vperm.xlu0 %312, %v310
    %v314 = vpop.permute.xlu0 %313
    %v316 = vmul.f32 %v314, %v265
    %vm317 = vcmask 779776
    %v318 = vsel %vm317, %v316, 0.0
    %v319 = vrot.slane %v318, 4
    %v320 = vadd.f32 %v318, %v319
    %v321 = vrot.slane %v320, 2
    %v322 = vadd.f32 %v320, %v321
    %v323 = vrot.slane %v322, 1
    %v324 = vadd.f32 %v322, %v323
    %326 = vrot.lane.b32.xlu0 %v265, 64
    %v327 = vpop.permute.xlu0 %326
    %v328 = vsel %vm80, %v327, 0
    %330 = vmatprep.subr.mxu0 0.0
    %331 = vmatpush1.msra.mxu0 %v162
    %332 = vmatprep.subr.mxu0 0.0
    %333 = vmatpush1.msra.mxu0 %v163
    %334 = vmatprep.subr.mxu0 0.0
    %335 = vmatpush1.msra.mxu0 %v164
    %336 = vmatprep.subr.mxu0 0.0
    %337 = vmatpush1.msra.mxu0 %v165
    %338 = vmatprep.subr.mxu0 0.0
    %339 = vmatpush1.msra.mxu0 0.0
    %340 = vmatprep.subr.mxu0 0.0
    %341 = vmatpush1.msra.mxu0 0.0
    %342 = vmatprep.subr.mxu0 0.0
    %343 = vmatpush1.msra.mxu0 0.0
    %344 = vmatprep.subr.mxu0 0.0
    %345 = vmatpush1.msra.mxu0 0.0
    %346 = vmatprep.subr.mxu0 0.0
    %347 = vmatpush1.msra.mxu0 0.0
    %348 = vmatprep.subr.mxu0 0.0
    %349 = vmatpush1.msra.mxu0 0.0
    %350 = vmatprep.subr.mxu0 0.0
    %351 = vmatpush1.msra.mxu0 0.0
    %352 = vmatprep.subr.mxu0 0.0
    %353 = vmatpush1.msra.mxu0 0.0
    %354 = vmatprep.subr.mxu0 0.0
    %355 = vmatpush1.msra.mxu0 0.0
    %356 = vmatprep.subr.mxu0 0.0
    %357 = vmatpush1.msra.mxu0 0.0
    %358 = vmatprep.subr.mxu0 0.0
    %359 = vmatpush1.msra.mxu0 0.0
    %360 = vmatprep.subr.mxu0 0.0
    %361 = vmatpush1.msra.mxu0 0.0
    %362 = vmatprep.subr.mxu0 0.0
    %363 = vmatpush1.msra.mxu0 0.0
    %364 = vmatprep.subr.mxu0 0.0
    %365 = vmatpush1.msra.mxu0 0.0
    %366 = vmatprep.subr.mxu0 0.0
    %367 = vmatpush1.msra.mxu0 0.0
    %368 = vmatprep.subr.mxu0 0.0
    %369 = vmatpush1.msra.mxu0 0.0
    %370 = vmatprep.subr.mxu0 0.0
    %371 = vmatpush1.msra.mxu0 0.0
    %372 = vmatprep.subr.mxu0 0.0
    %373 = vmatpush1.msra.mxu0 0.0
    %374 = vmatprep.subr.mxu0 0.0
    %375 = vmatpush1.msra.mxu0 0.0
    %376 = vmatprep.subr.mxu0 0.0
    %377 = vmatpush1.msra.mxu0 0.0
    %378 = vmatprep.subr.mxu0 0.0
    %379 = vmatpush1.msra.mxu0 0.0
    %380 = vmatprep.subr.mxu0 0.0
    %381 = vmatpush1.msra.mxu0 0.0
    %382 = vmatprep.subr.mxu0 0.0
    %383 = vmatpush1.msra.mxu0 0.0
    %384 = vmatprep.subr.mxu0 0.0
    %385 = vmatpush1.msra.mxu0 0.0
    %386 = vmatprep.subr.mxu0 0.0
    %387 = vmatpush1.msra.mxu0 0.0
    %388 = vmatprep.subr.mxu0 0.0
    %389 = vmatpush1.msra.mxu0 0.0
    %390 = vmatprep.subr.mxu0 0.0
    %391 = vmatpush1.msra.mxu0 0.0
    %392 = vmatprep.subr.mxu0 0.0
    %393 = vmatpush1.msra.mxu0 0.0
    %394 = vmatprep.mubr.f32.mxu0 0.0
    %395 = vmatmul.mubr.f32.gmra.mrb[0].mxu0 %v328
    %v396 = vpop.f32.mrb[0].mxu0
    %v397 = vadd.f32 0.0, %v396
    %v398 = vpop.f32.mrb[0].mxu0
    %399 = vdwg.mxu0
    %v401 = vrot.slane %v397, 6
    %v403 = vadd.f32 %v154, %v401
    %v404 = vxor.u32 %v403, 2147483648
    %v405 = vmul.f32 %v404, 1.442695
    %v406 = vpow.pop %v405
    %v407 = vadd.f32 %v406, 1.0
    %v408 = vrcp.pop %v407
    %v409 = vmul.f32 1.0, %v408
    %v410 = vtanh.pop %v403
    %v412 = vrot.slane %v259, 6
    %v414 = vmul.f32 %v409, %v412
    %416 = vrot.lane.b32.xlu0 %v410, 32
    %v417 = vpop.permute.xlu0 %416
    %v419 = vmul.f32 %v409, %v417
    %421 = vrot.lane.b32.xlu0 %v419, 32
    %v422 = vpop.permute.xlu0 %421
    %v424 = vadd.f32 %v414, %v422
    %v425 = vtanh.pop %v424
    %427 = vrot.lane.b32.xlu0 %v425, 32
    %v428 = vpop.permute.xlu0 %427
    %v430 = vmul.f32 %v409, %v428
    %v431 = vmul.f32 %v430, %v272
    %433 = vrot.lane.b32.xlu0 %v431, 64
    %v434 = vpop.permute.xlu0 %433
    %vm436 = vcmask 257026
    %v437 = vsel %vm436, %v434, 0.0
    %438 = vadd.xlane.f32.xlu0 %v437
    %v439 = vpop.xlane.xlu0 %438
    %v440 = vadd.f32 %v439, %v287
    %v441 = vtanh.pop %v440
    %vm442 = vcmask 3074
    %v443 = vsel %vm442, %v441, -inf
    %v444 = vrot.slane %v443, 4
    %v445 = vmax.f32 %v443, %v444
    %v446 = vrot.slane %v445, 2
    %v447 = vmax.f32 %v445, %v446
    %v448 = vrot.slane %v447, 1
    %v449 = vmax.f32 %v447, %v448
    %v450 = vsub.f32 %v441, %v449
    %v451 = vmul.f32 %v450, 1.442695
    %v452 = vpow.pop %v451
    %v454 = vrot.slane %v452, 2
    %v456 = vsel %vm291, %v454, 0.0
    %v457 = vrot.slane %v456, 4
    %v458 = vadd.f32 %v456, %v457
    %v459 = vrot.slane %v458, 2
    %v460 = vadd.f32 %v458, %v459
    %v461 = vrot.slane %v460, 1
    %v462 = vadd.f32 %v460, %v461
    %v463 = vrcp.pop %v462
    %v464 = vmul.f32 %v452, %v463
    %466 = vset.pattern.permute.xlu0 0
    %467 = vperm.xlu0 %466, %v464
    %v468 = vpop.permute.xlu0 %467
    %v470 = vmul.f32 %v468, %v430
    %v472 = vrot.slane %v470, 2
    %v474 = vsel %vm317, %v472, 0.0
    %v475 = vrot.slane %v474, 4
    %v476 = vadd.f32 %v474, %v475
    %v477 = vrot.slane %v476, 2
    %v478 = vadd.f32 %v476, %v477
    %v479 = vrot.slane %v478, 1
    %v480 = vadd.f32 %v478, %v479
    %v482 = vrot.slane %v430, 2
    %483 = vrot.lane.b32.xlu0 %v482, 64
    %v484 = vpop.permute.xlu0 %483
    %v485 = vsel %vm80, %v484, 0
    %487 = vmatprep.subr.mxu0 0.0
    %488 = vmatpush1.msra.mxu0 %v162
    %489 = vmatprep.subr.mxu0 0.0
    %490 = vmatpush1.msra.mxu0 %v163
    %491 = vmatprep.subr.mxu0 0.0
    %492 = vmatpush1.msra.mxu0 %v164
    %493 = vmatprep.subr.mxu0 0.0
    %494 = vmatpush1.msra.mxu0 %v165
    %495 = vmatprep.subr.mxu0 0.0
    %496 = vmatpush1.msra.mxu0 0.0
    %497 = vmatprep.subr.mxu0 0.0
    %498 = vmatpush1.msra.mxu0 0.0
    %499 = vmatprep.subr.mxu0 0.0
    %500 = vmatpush1.msra.mxu0 0.0
    %501 = vmatprep.subr.mxu0 0.0
    %502 = vmatpush1.msra.mxu0 0.0
    %503 = vmatprep.subr.mxu0 0.0
    %504 = vmatpush1.msra.mxu0 0.0
    %505 = vmatprep.subr.mxu0 0.0
    %506 = vmatpush1.msra.mxu0 0.0
    %507 = vmatprep.subr.mxu0 0.0
    %508 = vmatpush1.msra.mxu0 0.0
    %509 = vmatprep.subr.mxu0 0.0
    %510 = vmatpush1.msra.mxu0 0.0
    %511 = vmatprep.subr.mxu0 0.0
    %512 = vmatpush1.msra.mxu0 0.0
    %513 = vmatprep.subr.mxu0 0.0
    %514 = vmatpush1.msra.mxu0 0.0
    %515 = vmatprep.subr.mxu0 0.0
    %516 = vmatpush1.msra.mxu0 0.0
    %517 = vmatprep.subr.mxu0 0.0
    %518 = vmatpush1.msra.mxu0 0.0
    %519 = vmatprep.subr.mxu0 0.0
    %520 = vmatpush1.msra.mxu0 0.0
    %521 = vmatprep.subr.mxu0 0.0
    %522 = vmatpush1.msra.mxu0 0.0
    %523 = vmatprep.subr.mxu0 0.0
    %524 = vmatpush1.msra.mxu0 0.0
    %525 = vmatprep.subr.mxu0 0.0
    %526 = vmatpush1.msra.mxu0 0.0
    %527 = vmatprep.subr.mxu0 0.0
    %528 = vmatpush1.msra.mxu0 0.0
    %529 = vmatprep.subr.mxu0 0.0
    %530 = vmatpush1.msra.mxu0 0.0
    %531 = vmatprep.subr.mxu0 0.0
    %532 = vmatpush1.msra.mxu0 0.0
    %533 = vmatprep.subr.mxu0 0.0
    %534 = vmatpush1.msra.mxu0 0.0
    %535 = vmatprep.subr.mxu0 0.0
    %536 = vmatpush1.msra.mxu0 0.0
    %537 = vmatprep.subr.mxu0 0.0
    %538 = vmatpush1.msra.mxu0 0.0
    %539 = vmatprep.subr.mxu0 0.0
    %540 = vmatpush1.msra.mxu0 0.0
    %541 = vmatprep.subr.mxu0 0.0
    %542 = vmatpush1.msra.mxu0 0.0
    %543 = vmatprep.subr.mxu0 0.0
    %544 = vmatpush1.msra.mxu0 0.0
    %545 = vmatprep.subr.mxu0 0.0
    %546 = vmatpush1.msra.mxu0 0.0
    %547 = vmatprep.subr.mxu0 0.0
    %548 = vmatpush1.msra.mxu0 0.0
    %549 = vmatprep.subr.mxu0 0.0
    %550 = vmatpush1.msra.mxu0 0.0
    %551 = vmatprep.mubr.f32.mxu0 0.0
    %552 = vmatmul.mubr.f32.gmra.mrb[0].mxu0 %v485
    %v553 = vpop.f32.mrb[0].mxu0
    %v554 = vadd.f32 0.0, %v553
    %v555 = vpop.f32.mrb[0].mxu0
    %556 = vdwg.mxu0
    %v558 = vrot.slane %v554, 4
    %v560 = vadd.f32 %v154, %v558
    %v561 = vxor.u32 %v560, 2147483648
    %v562 = vmul.f32 %v561, 1.442695
    %v563 = vpow.pop %v562
    %v564 = vadd.f32 %v563, 1.0
    %v565 = vrcp.pop %v564
    %v566 = vmul.f32 1.0, %v565
    %v567 = vtanh.pop %v560
    %v569 = vrot.slane %v424, 6
    %v571 = vmul.f32 %v566, %v569
    %573 = vrot.lane.b32.xlu0 %v567, 32
    %v574 = vpop.permute.xlu0 %573
    %v576 = vmul.f32 %v566, %v574
    %578 = vrot.lane.b32.xlu0 %v576, 32
    %v579 = vpop.permute.xlu0 %578
    %v581 = vadd.f32 %v571, %v579
    %v582 = vtanh.pop %v581
    %584 = vrot.lane.b32.xlu0 %v582, 32
    %v585 = vpop.permute.xlu0 %584
    %v587 = vmul.f32 %v566, %v585
    %v588 = vmul.f32 %v587, %v272
    %590 = vrot.lane.b32.xlu0 %v588, 64
    %v591 = vpop.permute.xlu0 %590
    %vm593 = vcmask 259076
    %v594 = vsel %vm593, %v591, 0.0
    %595 = vadd.xlane.f32.xlu0 %v594
    %v596 = vpop.xlane.xlu0 %595
    %v597 = vadd.f32 %v596, %v287
    %v598 = vtanh.pop %v597
    %vm599 = vcmask 5124
    %v600 = vsel %vm599, %v598, -inf
    %v601 = vrot.slane %v600, 4
    %v602 = vmax.f32 %v600, %v601
    %v603 = vrot.slane %v602, 2
    %v604 = vmax.f32 %v602, %v603
    %v605 = vrot.slane %v604, 1
    %v606 = vmax.f32 %v604, %v605
    %v607 = vsub.f32 %v598, %v606
    %v608 = vmul.f32 %v607, 1.442695
    %v609 = vpow.pop %v608
    %v611 = vrot.slane %v609, 4
    %v613 = vsel %vm291, %v611, 0.0
    %v614 = vrot.slane %v613, 4
    %v615 = vadd.f32 %v613, %v614
    %v616 = vrot.slane %v615, 2
    %v617 = vadd.f32 %v615, %v616
    %v618 = vrot.slane %v617, 1
    %v619 = vadd.f32 %v617, %v618
    %v620 = vrcp.pop %v619
    %v621 = vmul.f32 %v609, %v620
    %623 = vset.pattern.permute.xlu0 0
    %624 = vperm.xlu0 %623, %v621
    %v625 = vpop.permute.xlu0 %624
    %v627 = vmul.f32 %v625, %v587
    %v629 = vrot.slane %v627, 4
    %v631 = vsel %vm317, %v629, 0.0
    %v632 = vrot.slane %v631, 4
    %v633 = vadd.f32 %v631, %v632
    %v634 = vrot.slane %v633, 2
    %v635 = vadd.f32 %v633, %v634
    %v636 = vrot.slane %v635, 1
    %v637 = vadd.f32 %v635, %v636
    %v639 = vrot.slane %v587, 4
    %640 = vrot.lane.b32.xlu0 %v639, 64
    %v641 = vpop.permute.xlu0 %640
    %v642 = vsel %vm80, %v641, 0
    %644 = vmatprep.subr.mxu0 0.0
    %645 = vmatpush1.msra.mxu0 %v162
    %646 = vmatprep.subr.mxu0 0.0
    %647 = vmatpush1.msra.mxu0 %v163
    %648 = vmatprep.subr.mxu0 0.0
    %649 = vmatpush1.msra.mxu0 %v164
    %650 = vmatprep.subr.mxu0 0.0
    %651 = vmatpush1.msra.mxu0 %v165
    %652 = vmatprep.subr.mxu0 0.0
    %653 = vmatpush1.msra.mxu0 0.0
    %654 = vmatprep.subr.mxu0 0.0
    %655 = vmatpush1.msra.mxu0 0.0
    %656 = vmatprep.subr.mxu0 0.0
    %657 = vmatpush1.msra.mxu0 0.0
    %658 = vmatprep.subr.mxu0 0.0
    %659 = vmatpush1.msra.mxu0 0.0
    %660 = vmatprep.subr.mxu0 0.0
    %661 = vmatpush1.msra.mxu0 0.0
    %662 = vmatprep.subr.mxu0 0.0
    %663 = vmatpush1.msra.mxu0 0.0
    %664 = vmatprep.subr.mxu0 0.0
    %665 = vmatpush1.msra.mxu0 0.0
    %666 = vmatprep.subr.mxu0 0.0
    %667 = vmatpush1.msra.mxu0 0.0
    %668 = vmatprep.subr.mxu0 0.0
    %669 = vmatpush1.msra.mxu0 0.0
    %670 = vmatprep.subr.mxu0 0.0
    %671 = vmatpush1.msra.mxu0 0.0
    %672 = vmatprep.subr.mxu0 0.0
    %673 = vmatpush1.msra.mxu0 0.0
    %674 = vmatprep.subr.mxu0 0.0
    %675 = vmatpush1.msra.mxu0 0.0
    %676 = vmatprep.subr.mxu0 0.0
    %677 = vmatpush1.msra.mxu0 0.0
    %678 = vmatprep.subr.mxu0 0.0
    %679 = vmatpush1.msra.mxu0 0.0
    %680 = vmatprep.subr.mxu0 0.0
    %681 = vmatpush1.msra.mxu0 0.0
    %682 = vmatprep.subr.mxu0 0.0
    %683 = vmatpush1.msra.mxu0 0.0
    %684 = vmatprep.subr.mxu0 0.0
    %685 = vmatpush1.msra.mxu0 0.0
    %686 = vmatprep.subr.mxu0 0.0
    %687 = vmatpush1.msra.mxu0 0.0
    %688 = vmatprep.subr.mxu0 0.0
    %689 = vmatpush1.msra.mxu0 0.0
    %690 = vmatprep.subr.mxu0 0.0
    %691 = vmatpush1.msra.mxu0 0.0
    %692 = vmatprep.subr.mxu0 0.0
    %693 = vmatpush1.msra.mxu0 0.0
    %694 = vmatprep.subr.mxu0 0.0
    %695 = vmatpush1.msra.mxu0 0.0
    %696 = vmatprep.subr.mxu0 0.0
    %697 = vmatpush1.msra.mxu0 0.0
    %698 = vmatprep.subr.mxu0 0.0
    %699 = vmatpush1.msra.mxu0 0.0
    %700 = vmatprep.subr.mxu0 0.0
    %701 = vmatpush1.msra.mxu0 0.0
    %702 = vmatprep.subr.mxu0 0.0
    %703 = vmatpush1.msra.mxu0 0.0
    %704 = vmatprep.subr.mxu0 0.0
    %705 = vmatpush1.msra.mxu0 0.0
    %706 = vmatprep.subr.mxu0 0.0
    %707 = vmatpush1.msra.mxu0 0.0
    %708 = vmatprep.mubr.f32.mxu0 0.0
    %709 = vmatmul.mubr.f32.gmra.mrb[0].mxu0 %v642
    %v710 = vpop.f32.mrb[0].mxu0
    %v711 = vadd.f32 0.0, %v710
    %v712 = vpop.f32.mrb[0].mxu0
    %713 = vdwg.mxu0
    %v715 = vrot.slane %v711, 2
    %v717 = vadd.f32 %v154, %v715
    %v718 = vxor.u32 %v717, 2147483648
    %v719 = vmul.f32 %v718, 1.442695
    %v720 = vpow.pop %v719
    %v721 = vadd.f32 %v720, 1.0
    %v722 = vrcp.pop %v721
    %v723 = vmul.f32 1.0, %v722
    %v724 = vtanh.pop %v717
    %v726 = vrot.slane %v581, 6
    %v728 = vmul.f32 %v723, %v726
    %730 = vrot.lane.b32.xlu0 %v724, 32
    %v731 = vpop.permute.xlu0 %730
    %v733 = vmul.f32 %v723, %v731
    %735 = vrot.lane.b32.xlu0 %v733, 32
    %v736 = vpop.permute.xlu0 %735
    %v738 = vadd.f32 %v728, %v736
    %v739 = vtanh.pop %v738
    %741 = vrot.lane.b32.xlu0 %v739, 32
    %v742 = vpop.permute.xlu0 %741
    %v744 = vmul.f32 %v723, %v742
    %v745 = vmul.f32 %v744, %v272
    %747 = vrot.lane.b32.xlu0 %v745, 64
    %v748 = vpop.permute.xlu0 %747
    %vm750 = vcmask 261126
    %v751 = vsel %vm750, %v748, 0.0
    %752 = vadd.xlane.f32.xlu0 %v751
    %v753 = vpop.xlane.xlu0 %752
    %v754 = vadd.f32 %v753, %v287
    %v755 = vtanh.pop %v754
    %vm756 = vcmask 7174
    %v757 = vsel %vm756, %v755, -inf
    %v758 = vrot.slane %v757, 4
    %v759 = vmax.f32 %v757, %v758
    %v760 = vrot.slane %v759, 2
    %v761 = vmax.f32 %v759, %v760
    %v762 = vrot.slane %v761, 1
    %v763 = vmax.f32 %v761, %v762
    %v764 = vsub.f32 %v755, %v763
    %v765 = vmul.f32 %v764, 1.442695
    %v766 = vpow.pop %v765
    %v768 = vrot.slane %v766, 6
    %v770 = vsel %vm291, %v768, 0.0
    %v771 = vrot.slane %v770, 4
    %v772 = vadd.f32 %v770, %v771
    %v773 = vrot.slane %v772, 2
    %v774 = vadd.f32 %v772, %v773
    %v775 = vrot.slane %v774, 1
    %v776 = vadd.f32 %v774, %v775
    %v777 = vrcp.pop %v776
    %v778 = vmul.f32 %v766, %v777
    %780 = vset.pattern.permute.xlu0 0
    %781 = vperm.xlu0 %780, %v778
    %v782 = vpop.permute.xlu0 %781
    %v784 = vmul.f32 %v782, %v744
    %v786 = vrot.slane %v784, 6
    %v788 = vsel %vm317, %v786, 0.0
    %v789 = vrot.slane %v788, 4
    %v790 = vadd.f32 %v788, %v789
    %v791 = vrot.slane %v790, 2
    %v792 = vadd.f32 %v790, %v791
    %v793 = vrot.slane %v792, 1
    %v794 = vadd.f32 %v792, %v793
    %v796 = vrot.slane %v744, 6
    %797 = vrot.lane.b32.xlu0 %v796, 64
    %v798 = vpop.permute.xlu0 %797
    %v799 = vsel %vm80, %v798, 0
    %801 = vmatprep.subr.mxu0 0.0
    %802 = vmatpush1.msra.mxu0 %v162
    %803 = vmatprep.subr.mxu0 0.0
    %804 = vmatpush1.msra.mxu0 %v163
    %805 = vmatprep.subr.mxu0 0.0
    %806 = vmatpush1.msra.mxu0 %v164
    %807 = vmatprep.subr.mxu0 0.0
    %808 = vmatpush1.msra.mxu0 %v165
    %809 = vmatprep.subr.mxu0 0.0
    %810 = vmatpush1.msra.mxu0 0.0
    %811 = vmatprep.subr.mxu0 0.0
    %812 = vmatpush1.msra.mxu0 0.0
    %813 = vmatprep.subr.mxu0 0.0
    %814 = vmatpush1.msra.mxu0 0.0
    %815 = vmatprep.subr.mxu0 0.0
    %816 = vmatpush1.msra.mxu0 0.0
    %817 = vmatprep.subr.mxu0 0.0
    %818 = vmatpush1.msra.mxu0 0.0
    %819 = vmatprep.subr.mxu0 0.0
    %820 = vmatpush1.msra.mxu0 0.0
    %821 = vmatprep.subr.mxu0 0.0
    %822 = vmatpush1.msra.mxu0 0.0
    %823 = vmatprep.subr.mxu0 0.0
    %824 = vmatpush1.msra.mxu0 0.0
    %825 = vmatprep.subr.mxu0 0.0
    %826 = vmatpush1.msra.mxu0 0.0
    %827 = vmatprep.subr.mxu0 0.0
    %828 = vmatpush1.msra.mxu0 0.0
    %829 = vmatprep.subr.mxu0 0.0
    %830 = vmatpush1.msra.mxu0 0.0
    %831 = vmatprep.subr.mxu0 0.0
    %832 = vmatpush1.msra.mxu0 0.0
    %833 = vmatprep.subr.mxu0 0.0
    %834 = vmatpush1.msra.mxu0 0.0
    %835 = vmatprep.subr.mxu0 0.0
    %836 = vmatpush1.msra.mxu0 0.0
    %837 = vmatprep.subr.mxu0 0.0
    %838 = vmatpush1.msra.mxu0 0.0
    %839 = vmatprep.subr.mxu0 0.0
    %840 = vmatpush1.msra.mxu0 0.0
    %841 = vmatprep.subr.mxu0 0.0
    %842 = vmatpush1.msra.mxu0 0.0
    %843 = vmatprep.subr.mxu0 0.0
    %844 = vmatpush1.msra.mxu0 0.0
    %845 = vmatprep.subr.mxu0 0.0
    %846 = vmatpush1.msra.mxu0 0.0
    %847 = vmatprep.subr.mxu0 0.0
    %848 = vmatpush1.msra.mxu0 0.0
    %849 = vmatprep.subr.mxu0 0.0
    %850 = vmatpush1.msra.mxu0 0.0
    %851 = vmatprep.subr.mxu0 0.0
    %852 = vmatpush1.msra.mxu0 0.0
    %853 = vmatprep.subr.mxu0 0.0
    %854 = vmatpush1.msra.mxu0 0.0
    %855 = vmatprep.subr.mxu0 0.0
    %856 = vmatpush1.msra.mxu0 0.0
    %857 = vmatprep.subr.mxu0 0.0
    %858 = vmatpush1.msra.mxu0 0.0
    %859 = vmatprep.subr.mxu0 0.0
    %860 = vmatpush1.msra.mxu0 0.0
    %861 = vmatprep.subr.mxu0 0.0
    %862 = vmatpush1.msra.mxu0 0.0
    %863 = vmatprep.subr.mxu0 0.0
    %864 = vmatpush1.msra.mxu0 0.0
    %865 = vmatprep.mubr.f32.mxu0 0.0
    %866 = vmatmul.mubr.f32.gmra.mrb[0].mxu0 %v799
    %v867 = vpop.f32.mrb[0].mxu0
    %v868 = vadd.f32 0.0, %v867
    %v869 = vpop.f32.mrb[0].mxu0
    %870 = vdwg.mxu0
    %v871 = vadd.f32 %v159, %v868
    %v872 = vxor.u32 %v871, 2147483648
    %v873 = vmul.f32 %v872, 1.442695
    %v874 = vpow.pop %v873
    %v875 = vadd.f32 %v874, 1.0
    %v876 = vrcp.pop %v875
    %v877 = vmul.f32 1.0, %v876
    %v878 = vtanh.pop %v871
    %v880 = vrot.slane %v738, 6
    %v882 = vmul.f32 %v877, %v880
    %884 = vrot.lane.b32.xlu0 %v878, 32
    %v885 = vpop.permute.xlu0 %884
    %v887 = vmul.f32 %v877, %v885
    %889 = vrot.lane.b32.xlu0 %v887, 32
    %v890 = vpop.permute.xlu0 %889
    %v892 = vadd.f32 %v882, %v890
    %v893 = vtanh.pop %v892
    %895 = vrot.lane.b32.xlu0 %v893, 32
    %v896 = vpop.permute.xlu0 %895
    %v898 = vmul.f32 %v877, %v896
    %v899 = vmul.f32 %v898, %v272
    %901 = vrot.lane.b32.xlu0 %v899, 64
    %v902 = vpop.permute.xlu0 %901
    %v904 = vsel %vm279, %v902, 0.0
    %905 = vadd.xlane.f32.xlu0 %v904
    %v906 = vpop.xlane.xlu0 %905
    %v907 = vadd.f32 %v906, %v287
    %v908 = vtanh.pop %v907
    %v909 = vsel %vm291, %v908, -inf
    %v910 = vrot.slane %v909, 4
    %v911 = vmax.f32 %v909, %v910
    %v912 = vrot.slane %v911, 2
    %v913 = vmax.f32 %v911, %v912
    %v914 = vrot.slane %v913, 1
    %v915 = vmax.f32 %v913, %v914
    %v916 = vsub.f32 %v908, %v915
    %v917 = vmul.f32 %v916, 1.442695
    %v918 = vpow.pop %v917
    %v919 = vsel %vm291, %v918, 0.0
    %v920 = vrot.slane %v919, 4
    %v921 = vadd.f32 %v919, %v920
    %v922 = vrot.slane %v921, 2
    %v923 = vadd.f32 %v921, %v922
    %v924 = vrot.slane %v923, 1
    %v925 = vadd.f32 %v923, %v924
    %v926 = vrcp.pop %v925
    %v927 = vmul.f32 %v918, %v926
    %929 = vset.pattern.permute.xlu0 0
    %930 = vperm.xlu0 %929, %v927
    %v931 = vpop.permute.xlu0 %930
    %v933 = vmul.f32 %v931, %v898
    %v934 = vsel %vm317, %v933, 0.0
    %v935 = vrot.slane %v934, 4
    %v936 = vadd.f32 %v934, %v935
    %v937 = vrot.slane %v936, 2
    %v938 = vadd.f32 %v936, %v937
    %v939 = vrot.slane %v938, 1
    %v940 = vadd.f32 %v938, %v939
    %942 = vrot.lane.b32.xlu0 %v898, 64
    %v943 = vpop.permute.xlu0 %942
    %v944 = vsel %vm80, %v943, 0
    %946 = vmatprep.subr.mxu0 0.0
    %947 = vmatpush1.msra.mxu0 %v162
    %948 = vmatprep.subr.mxu0 0.0
    %949 = vmatpush1.msra.mxu0 %v163
    %950 = vmatprep.subr.mxu0 0.0
    %951 = vmatpush1.msra.mxu0 %v164
    %952 = vmatprep.subr.mxu0 0.0
    %953 = vmatpush1.msra.mxu0 %v165
    %954 = vmatprep.subr.mxu0 0.0
    %955 = vmatpush1.msra.mxu0 0.0
    %956 = vmatprep.subr.mxu0 0.0
    %957 = vmatpush1.msra.mxu0 0.0
    %958 = vmatprep.subr.mxu0 0.0
    %959 = vmatpush1.msra.mxu0 0.0
    %960 = vmatprep.subr.mxu0 0.0
    %961 = vmatpush1.msra.mxu0 0.0
    %962 = vmatprep.subr.mxu0 0.0
    %963 = vmatpush1.msra.mxu0 0.0
    %964 = vmatprep.subr.mxu0 0.0
    %965 = vmatpush1.msra.mxu0 0.0
    %966 = vmatprep.subr.mxu0 0.0
    %967 = vmatpush1.msra.mxu0 0.0
    %968 = vmatprep.subr.mxu0 0.0
    %969 = vmatpush1.msra.mxu0 0.0
    %970 = vmatprep.subr.mxu0 0.0
    %971 = vmatpush1.msra.mxu0 0.0
    %972 = vmatprep.subr.mxu0 0.0
    %973 = vmatpush1.msra.mxu0 0.0
    %974 = vmatprep.subr.mxu0 0.0
    %975 = vmatpush1.msra.mxu0 0.0
    %976 = vmatprep.subr.mxu0 0.0
    %977 = vmatpush1.msra.mxu0 0.0
    %978 = vmatprep.subr.mxu0 0.0
    %979 = vmatpush1.msra.mxu0 0.0
    %980 = vmatprep.subr.mxu0 0.0
    %981 = vmatpush1.msra.mxu0 0.0
    %982 = vmatprep.subr.mxu0 0.0
    %983 = vmatpush1.msra.mxu0 0.0
    %984 = vmatprep.subr.mxu0 0.0
    %985 = vmatpush1.msra.mxu0 0.0
    %986 = vmatprep.subr.mxu0 0.0
    %987 = vmatpush1.msra.mxu0 0.0
    %988 = vmatprep.subr.mxu0 0.0
    %989 = vmatpush1.msra.mxu0 0.0
    %990 = vmatprep.subr.mxu0 0.0
    %991 = vmatpush1.msra.mxu0 0.0
    %992 = vmatprep.subr.mxu0 0.0
    %993 = vmatpush1.msra.mxu0 0.0
    %994 = vmatprep.subr.mxu0 0.0
    %995 = vmatpush1.msra.mxu0 0.0
    %996 = vmatprep.subr.mxu0 0.0
    %997 = vmatpush1.msra.mxu0 0.0
    %998 = vmatprep.subr.mxu0 0.0
    %999 = vmatpush1.msra.mxu0 0.0
    %1000 = vmatprep.subr.mxu0 0.0
    %1001 = vmatpush1.msra.mxu0 0.0
    %1002 = vmatprep.subr.mxu0 0.0
    %1003 = vmatpush1.msra.mxu0 0.0
    %1004 = vmatprep.subr.mxu0 0.0
    %1005 = vmatpush1.msra.mxu0 0.0
    %1006 = vmatprep.subr.mxu0 0.0
    %1007 = vmatpush1.msra.mxu0 0.0
    %1008 = vmatprep.subr.mxu0 0.0
    %1009 = vmatpush1.msra.mxu0 0.0
    %1010 = vmatprep.mubr.f32.mxu0 0.0
    %1011 = vmatmul.mubr.f32.gmra.mrb[0].mxu0 %v944
    %v1012 = vpop.f32.mrb[0].mxu0
    %v1013 = vadd.f32 0.0, %v1012
    %v1014 = vpop.f32.mrb[0].mxu0
    %1015 = vdwg.mxu0
    %v1017 = vrot.slane %v1013, 6
    %v1019 = vadd.f32 %v159, %v1017
    %v1020 = vxor.u32 %v1019, 2147483648
    %v1021 = vmul.f32 %v1020, 1.442695
    %v1022 = vpow.pop %v1021
    %v1023 = vadd.f32 %v1022, 1.0
    %v1024 = vrcp.pop %v1023
    %v1025 = vmul.f32 1.0, %v1024
    %v1026 = vtanh.pop %v1019
    %v1028 = vrot.slane %v892, 6
    %v1030 = vmul.f32 %v1025, %v1028
    %1032 = vrot.lane.b32.xlu0 %v1026, 32
    %v1033 = vpop.permute.xlu0 %1032
    %v1035 = vmul.f32 %v1025, %v1033
    %1037 = vrot.lane.b32.xlu0 %v1035, 32
    %v1038 = vpop.permute.xlu0 %1037
    %v1040 = vadd.f32 %v1030, %v1038
    %v1041 = vtanh.pop %v1040
    %1043 = vrot.lane.b32.xlu0 %v1041, 32
    %v1044 = vpop.permute.xlu0 %1043
    %v1046 = vmul.f32 %v1025, %v1044
    %v1047 = vmul.f32 %v1046, %v272
    %1049 = vrot.lane.b32.xlu0 %v1047, 64
    %v1050 = vpop.permute.xlu0 %1049
    %v1052 = vsel %vm436, %v1050, 0.0
    %1053 = vadd.xlane.f32.xlu0 %v1052
    %v1054 = vpop.xlane.xlu0 %1053
    %v1055 = vadd.f32 %v1054, %v287
    %v1056 = vtanh.pop %v1055
    %v1057 = vsel %vm442, %v1056, -inf
    %v1058 = vrot.slane %v1057, 4
    %v1059 = vmax.f32 %v1057, %v1058
    %v1060 = vrot.slane %v1059, 2
    %v1061 = vmax.f32 %v1059, %v1060
    %v1062 = vrot.slane %v1061, 1
    %v1063 = vmax.f32 %v1061, %v1062
    %v1064 = vsub.f32 %v1056, %v1063
    %v1065 = vmul.f32 %v1064, 1.442695
    %v1066 = vpow.pop %v1065
    %v1068 = vrot.slane %v1066, 2
    %v1070 = vsel %vm291, %v1068, 0.0
    %v1071 = vrot.slane %v1070, 4
    %v1072 = vadd.f32 %v1070, %v1071
    %v1073 = vrot.slane %v1072, 2
    %v1074 = vadd.f32 %v1072, %v1073
    %v1075 = vrot.slane %v1074, 1
    %v1076 = vadd.f32 %v1074, %v1075
    %v1077 = vrcp.pop %v1076
    %v1078 = vmul.f32 %v1066, %v1077
    %1080 = vset.pattern.permute.xlu0 0
    %1081 = vperm.xlu0 %1080, %v1078
    %v1082 = vpop.permute.xlu0 %1081
    %v1084 = vmul.f32 %v1082, %v1046
    %v1086 = vrot.slane %v1084, 2
    %v1088 = vsel %vm317, %v1086, 0.0
    %v1089 = vrot.slane %v1088, 4
    %v1090 = vadd.f32 %v1088, %v1089
    %v1091 = vrot.slane %v1090, 2
    %v1092 = vadd.f32 %v1090, %v1091
    %v1093 = vrot.slane %v1092, 1
    %v1094 = vadd.f32 %v1092, %v1093
    %v1096 = vrot.slane %v1046, 2
    %1097 = vrot.lane.b32.xlu0 %v1096, 64
    %v1098 = vpop.permute.xlu0 %1097
    %v1099 = vsel %vm80, %v1098, 0
    %1101 = vmatprep.subr.mxu0 0.0
    %1102 = vmatpush1.msra.mxu0 %v162
    %1103 = vmatprep.subr.mxu0 0.0
    %1104 = vmatpush1.msra.mxu0 %v163
    %1105 = vmatprep.subr.mxu0 0.0
    %1106 = vmatpush1.msra.mxu0 %v164
    %1107 = vmatprep.subr.mxu0 0.0
    %1108 = vmatpush1.msra.mxu0 %v165
    %1109 = vmatprep.subr.mxu0 0.0
    %1110 = vmatpush1.msra.mxu0 0.0
    %1111 = vmatprep.subr.mxu0 0.0
    %1112 = vmatpush1.msra.mxu0 0.0
    %1113 = vmatprep.subr.mxu0 0.0
    %1114 = vmatpush1.msra.mxu0 0.0
    %1115 = vmatprep.subr.mxu0 0.0
    %1116 = vmatpush1.msra.mxu0 0.0
    %1117 = vmatprep.subr.mxu0 0.0
    %1118 = vmatpush1.msra.mxu0 0.0
    %1119 = vmatprep.subr.mxu0 0.0
    %1120 = vmatpush1.msra.mxu0 0.0
    %1121 = vmatprep.subr.mxu0 0.0
    %1122 = vmatpush1.msra.mxu0 0.0
    %1123 = vmatprep.subr.mxu0 0.0
    %1124 = vmatpush1.msra.mxu0 0.0
    %1125 = vmatprep.subr.mxu0 0.0
    %1126 = vmatpush1.msra.mxu0 0.0
    %1127 = vmatprep.subr.mxu0 0.0
    %1128 = vmatpush1.msra.mxu0 0.0
    %1129 = vmatprep.subr.mxu0 0.0
    %1130 = vmatpush1.msra.mxu0 0.0
    %1131 = vmatprep.subr.mxu0 0.0
    %1132 = vmatpush1.msra.mxu0 0.0
    %1133 = vmatprep.subr.mxu0 0.0
    %1134 = vmatpush1.msra.mxu0 0.0
    %1135 = vmatprep.subr.mxu0 0.0
    %1136 = vmatpush1.msra.mxu0 0.0
    %1137 = vmatprep.subr.mxu0 0.0
    %1138 = vmatpush1.msra.mxu0 0.0
    %1139 = vmatprep.subr.mxu0 0.0
    %1140 = vmatpush1.msra.mxu0 0.0
    %1141 = vmatprep.subr.mxu0 0.0
    %1142 = vmatpush1.msra.mxu0 0.0
    %1143 = vmatprep.subr.mxu0 0.0
    %1144 = vmatpush1.msra.mxu0 0.0
    %1145 = vmatprep.subr.mxu0 0.0
    %1146 = vmatpush1.msra.mxu0 0.0
    %1147 = vmatprep.subr.mxu0 0.0
    %1148 = vmatpush1.msra.mxu0 0.0
    %1149 = vmatprep.subr.mxu0 0.0
    %1150 = vmatpush1.msra.mxu0 0.0
    %1151 = vmatprep.subr.mxu0 0.0
    %1152 = vmatpush1.msra.mxu0 0.0
    %1153 = vmatprep.subr.mxu0 0.0
    %1154 = vmatpush1.msra.mxu0 0.0
    %1155 = vmatprep.subr.mxu0 0.0
    %1156 = vmatpush1.msra.mxu0 0.0
    %1157 = vmatprep.subr.mxu0 0.0
    %1158 = vmatpush1.msra.mxu0 0.0
    %1159 = vmatprep.subr.mxu0 0.0
    %1160 = vmatpush1.msra.mxu0 0.0
    %1161 = vmatprep.subr.mxu0 0.0
    %1162 = vmatpush1.msra.mxu0 0.0
    %1163 = vmatprep.subr.mxu0 0.0
    %1164 = vmatpush1.msra.mxu0 0.0
    %1165 = vmatprep.mubr.f32.mxu0 0.0
    %1166 = vmatmul.mubr.f32.gmra.mrb[0].mxu0 %v1099
    %v1167 = vpop.f32.mrb[0].mxu0
    %v1168 = vadd.f32 0.0, %v1167
    %v1169 = vpop.f32.mrb[0].mxu0
    %1170 = vdwg.mxu0
    %v1172 = vrot.slane %v1168, 4
    %v1174 = vadd.f32 %v159, %v1172
    %v1175 = vxor.u32 %v1174, 2147483648
    %v1176 = vmul.f32 %v1175, 1.442695
    %v1177 = vpow.pop %v1176
    %v1178 = vadd.f32 %v1177, 1.0
    %v1179 = vrcp.pop %v1178
    %v1180 = vmul.f32 1.0, %v1179
    %v1181 = vtanh.pop %v1174
    %v1183 = vrot.slane %v1040, 6
    %v1185 = vmul.f32 %v1180, %v1183
    %1187 = vrot.lane.b32.xlu0 %v1181, 32
    %v1188 = vpop.permute.xlu0 %1187
    %v1190 = vmul.f32 %v1180, %v1188
    %1192 = vrot.lane.b32.xlu0 %v1190, 32
    %v1193 = vpop.permute.xlu0 %1192
    %v1195 = vadd.f32 %v1185, %v1193
    %v1196 = vtanh.pop %v1195
    %1198 = vrot.lane.b32.xlu0 %v1196, 32
    %v1199 = vpop.permute.xlu0 %1198
    %v1201 = vmul.f32 %v1180, %v1199
    %v1202 = vmul.f32 %v1201, %v272
    %1204 = vrot.lane.b32.xlu0 %v1202, 64
    %v1205 = vpop.permute.xlu0 %1204
    %v1207 = vsel %vm593, %v1205, 0.0
    %1208 = vadd.xlane.f32.xlu0 %v1207
    %v1209 = vpop.xlane.xlu0 %1208
    %v1210 = vadd.f32 %v1209, %v287
    %v1211 = vtanh.pop %v1210
    %v1212 = vsel %vm599, %v1211, -inf
    %v1213 = vrot.slane %v1212, 4
    %v1214 = vmax.f32 %v1212, %v1213
    %v1215 = vrot.slane %v1214, 2
    %v1216 = vmax.f32 %v1214, %v1215
    %v1217 = vrot.slane %v1216, 1
    %v1218 = vmax.f32 %v1216, %v1217
    %v1219 = vsub.f32 %v1211, %v1218
    %v1220 = vmul.f32 %v1219, 1.442695
    %v1221 = vpow.pop %v1220
    %v1223 = vrot.slane %v1221, 4
    %v1225 = vsel %vm291, %v1223, 0.0
    %v1226 = vrot.slane %v1225, 4
    %v1227 = vadd.f32 %v1225, %v1226
    %v1228 = vrot.slane %v1227, 2
    %v1229 = vadd.f32 %v1227, %v1228
    %v1230 = vrot.slane %v1229, 1
    %v1231 = vadd.f32 %v1229, %v1230
    %v1232 = vrcp.pop %v1231
    %v1233 = vmul.f32 %v1221, %v1232
    %1235 = vset.pattern.permute.xlu0 0
    %1236 = vperm.xlu0 %1235, %v1233
    %v1237 = vpop.permute.xlu0 %1236
    %v1239 = vmul.f32 %v1237, %v1201
    %v1241 = vrot.slane %v1239, 4
    %v1243 = vsel %vm317, %v1241, 0.0
    %v1244 = vrot.slane %v1243, 4
    %v1245 = vadd.f32 %v1243, %v1244
    %v1246 = vrot.slane %v1245, 2
    %v1247 = vadd.f32 %v1245, %v1246
    %v1248 = vrot.slane %v1247, 1
    %v1249 = vadd.f32 %v1247, %v1248
    %v1251 = vrot.slane %v1201, 4
    %1252 = vrot.lane.b32.xlu0 %v1251, 64
    %v1253 = vpop.permute.xlu0 %1252
    %v1254 = vsel %vm80, %v1253, 0
    %1256 = vmatprep.subr.mxu0 0.0
    %1257 = vmatpush1.msra.mxu0 %v162
    %1258 = vmatprep.subr.mxu0 0.0
    %1259 = vmatpush1.msra.mxu0 %v163
    %1260 = vmatprep.subr.mxu0 0.0
    %1261 = vmatpush1.msra.mxu0 %v164
    %1262 = vmatprep.subr.mxu0 0.0
    %1263 = vmatpush1.msra.mxu0 %v165
    %1264 = vmatprep.subr.mxu0 0.0
    %1265 = vmatpush1.msra.mxu0 0.0
    %1266 = vmatprep.subr.mxu0 0.0
    %1267 = vmatpush1.msra.mxu0 0.0
    %1268 = vmatprep.subr.mxu0 0.0
    %1269 = vmatpush1.msra.mxu0 0.0
    %1270 = vmatprep.subr.mxu0 0.0
    %1271 = vmatpush1.msra.mxu0 0.0
    %1272 = vmatprep.subr.mxu0 0.0
    %1273 = vmatpush1.msra.mxu0 0.0
    %1274 = vmatprep.subr.mxu0 0.0
    %1275 = vmatpush1.msra.mxu0 0.0
    %1276 = vmatprep.subr.mxu0 0.0
    %1277 = vmatpush1.msra.mxu0 0.0
    %1278 = vmatprep.subr.mxu0 0.0
    %1279 = vmatpush1.msra.mxu0 0.0
    %1280 = vmatprep.subr.mxu0 0.0
    %1281 = vmatpush1.msra.mxu0 0.0
    %1282 = vmatprep.subr.mxu0 0.0
    %1283 = vmatpush1.msra.mxu0 0.0
    %1284 = vmatprep.subr.mxu0 0.0
    %1285 = vmatpush1.msra.mxu0 0.0
    %1286 = vmatprep.subr.mxu0 0.0
    %1287 = vmatpush1.msra.mxu0 0.0
    %1288 = vmatprep.subr.mxu0 0.0
    %1289 = vmatpush1.msra.mxu0 0.0
    %1290 = vmatprep.subr.mxu0 0.0
    %1291 = vmatpush1.msra.mxu0 0.0
    %1292 = vmatprep.subr.mxu0 0.0
    %1293 = vmatpush1.msra.mxu0 0.0
    %1294 = vmatprep.subr.mxu0 0.0
    %1295 = vmatpush1.msra.mxu0 0.0
    %1296 = vmatprep.subr.mxu0 0.0
    %1297 = vmatpush1.msra.mxu0 0.0
    %1298 = vmatprep.subr.mxu0 0.0
    %1299 = vmatpush1.msra.mxu0 0.0
    %1300 = vmatprep.subr.mxu0 0.0
    %1301 = vmatpush1.msra.mxu0 0.0
    %1302 = vmatprep.subr.mxu0 0.0
    %1303 = vmatpush1.msra.mxu0 0.0
    %1304 = vmatprep.subr.mxu0 0.0
    %1305 = vmatpush1.msra.mxu0 0.0
    %1306 = vmatprep.subr.mxu0 0.0
    %1307 = vmatpush1.msra.mxu0 0.0
    %1308 = vmatprep.subr.mxu0 0.0
    %1309 = vmatpush1.msra.mxu0 0.0
    %1310 = vmatprep.subr.mxu0 0.0
    %1311 = vmatpush1.msra.mxu0 0.0
    %1312 = vmatprep.subr.mxu0 0.0
    %1313 = vmatpush1.msra.mxu0 0.0
    %1314 = vmatprep.subr.mxu0 0.0
    %1315 = vmatpush1.msra.mxu0 0.0
    %1316 = vmatprep.subr.mxu0 0.0
    %1317 = vmatpush1.msra.mxu0 0.0
    %1318 = vmatprep.subr.mxu0 0.0
    %1319 = vmatpush1.msra.mxu0 0.0
    %1320 = vmatprep.mubr.f32.mxu0 0.0
    %1321 = vmatmul.mubr.f32.gmra.mrb[0].mxu0 %v1254
    %v1322 = vpop.f32.mrb[0].mxu0
    %v1323 = vadd.f32 0.0, %v1322
    %v1324 = vpop.f32.mrb[0].mxu0
    %1325 = vdwg.mxu0
    %v1327 = vrot.slane %v1323, 2
    %v1329 = vadd.f32 %v159, %v1327
    %v1330 = vxor.u32 %v1329, 2147483648
    %v1331 = vmul.f32 %v1330, 1.442695
    %v1332 = vpow.pop %v1331
    %v1333 = vadd.f32 %v1332, 1.0
    %v1334 = vrcp.pop %v1333
    %v1335 = vmul.f32 1.0, %v1334
    %v1336 = vtanh.pop %v1329
    %v1338 = vrot.slane %v1195, 6
    %v1340 = vmul.f32 %v1335, %v1338
    %1342 = vrot.lane.b32.xlu0 %v1336, 32
    %v1343 = vpop.permute.xlu0 %1342
    %v1345 = vmul.f32 %v1335, %v1343
    %1347 = vrot.lane.b32.xlu0 %v1345, 32
    %v1348 = vpop.permute.xlu0 %1347
    %v1350 = vadd.f32 %v1340, %v1348
    %v1351 = vtanh.pop %v1350
    %1353 = vrot.lane.b32.xlu0 %v1351, 32
    %v1354 = vpop.permute.xlu0 %1353
    %v1356 = vmul.f32 %v1335, %v1354
    %v1357 = vmul.f32 %v1356, %v272
    %1359 = vrot.lane.b32.xlu0 %v1357, 64
    %v1360 = vpop.permute.xlu0 %1359
    %v1362 = vsel %vm750, %v1360, 0.0
    %1363 = vadd.xlane.f32.xlu0 %v1362
    %v1364 = vpop.xlane.xlu0 %1363
    %v1365 = vadd.f32 %v1364, %v287
    %v1366 = vtanh.pop %v1365
    %v1367 = vsel %vm756, %v1366, -inf
    %v1368 = vrot.slane %v1367, 4
    %v1369 = vmax.f32 %v1367, %v1368
    %v1370 = vrot.slane %v1369, 2
    %v1371 = vmax.f32 %v1369, %v1370
    %v1372 = vrot.slane %v1371, 1
    %v1373 = vmax.f32 %v1371, %v1372
    %v1374 = vsub.f32 %v1366, %v1373
    %v1375 = vmul.f32 %v1374, 1.442695
    %v1376 = vpow.pop %v1375
    %v1378 = vrot.slane %v1376, 6
    %v1380 = vsel %vm291, %v1378, 0.0
    %v1381 = vrot.slane %v1380, 4
    %v1382 = vadd.f32 %v1380, %v1381
    %v1383 = vrot.slane %v1382, 2
    %v1384 = vadd.f32 %v1382, %v1383
    %v1385 = vrot.slane %v1384, 1
    %v1386 = vadd.f32 %v1384, %v1385
    %v1387 = vrcp.pop %v1386
    %v1388 = vmul.f32 %v1376, %v1387
    %1390 = vset.pattern.permute.xlu0 0
    %1391 = vperm.xlu0 %1390, %v1388
    %v1392 = vpop.permute.xlu0 %1391
    %v1394 = vmul.f32 %v1392, %v1356
    %v1396 = vrot.slane %v1394, 6
    %v1398 = vsel %vm317, %v1396, 0.0
    %v1399 = vrot.slane %v1398, 4
    %v1400 = vadd.f32 %v1398, %v1399
    %v1401 = vrot.slane %v1400, 2
    %v1402 = vadd.f32 %v1400, %v1401
    %v1403 = vrot.slane %v1402, 1
    %v1404 = vadd.f32 %v1402, %v1403
    %vm1405 = vcmask 1040384
    %v1406 = vsel %vm1405, %v324, %v480
    %vm1407 = vcmask 1041408
    %v1408 = vsel %vm1407, %v1406, %v637
    %vm1409 = vcmask 1042432
    %v1410 = vsel %vm1409, %v1408, %v794
    %vm1411 = vcmask 1043456
    %v1412 = vsel %vm1411, %v1410, %v940
    %vm1413 = vcmask 1044480
    %v1414 = vsel %vm1413, %v1412, %v1094
    %vm1415 = vcmask 1045504
    %v1416 = vsel %vm1415, %v1414, %v1249
    %vm1417 = vcmask 1046528
    %v1418 = vsel %vm1417, %v1416, %v1404
    %1420 = vrot.lane.b32.xlu0 %v1418, 64
    %v1421 = vpop.permute.xlu0 %1420
    %1423 = vst.msk [vmem:[#allocation9] sm:$0xff] %vm80, %v1421
    // Predicated region
    $region38: #{tpu_custom_call.1} parent=1 // pred_check
      _
    $region39: #{tpu_custom_call.1} parent=1 // pred_check_branch
      %1425 = sbr.rel (0) target = $region41
    $region40: #{tpu_custom_call.1} parent=1 // pred_region
      %s1427 = ssub.s32 128, 128
      %1428 = vsyncadd [#allocation5], %s1427
      %s1430 = sshll.u32 [#allocation9], 4
      %s1431 = int_to_ptr.vmem [resolvable:$true] %s1430
      %1433 = dma.vmem_to_hbm [thread:$0]  %s1431, 128, %s6, [#allocation5]
    $region41: #{tpu_custom_call.1} parent=1 // pred_fallthru
      _
    // Predicated region
    $region42: #{tpu_custom_call.1} parent=1 // pred_check
      _
    $region43: #{tpu_custom_call.1} parent=1 // pred_check_branch
      %1435 = sbr.rel (0) target = $region45
    $region44: #{tpu_custom_call.1} parent=1 // pred_region
      %1436 = dma.done [#allocation5], 128
    $region45: #{tpu_custom_call.1} parent=1 // pred_fallthru
      _
    %1437 = vsyncpa [#allocation4], 1
    %1438 = vsyncpa [#allocation7], 1
    %1439 = vsyncpa [#allocation5], 1

</llo_original>
